<compile_context>
chip_gen: v5e
topology: v5e:2x2
jax: 0.10.0
libtpu: 0.0.40
codegen_flags: <defaults>
</compile_context>

<pallas_src>
import math

import jax
import jax.numpy as jnp
from jax.experimental import pallas as pl
from jax.experimental.pallas import tpu as pltpu


def _make_kernel(seq_len, batch, embed_dim, num_heads, dff, compute_dtype,
                 approx_recip):
    S, B, E, H = seq_len, batch, embed_dim, num_heads
    Dh = E // H
    scale = 1.0 / math.sqrt(Dh)
    eps = 1e-5
    cdt = compute_dtype

    def layer_norm(t, g, beta):
        mu = jnp.mean(t, axis=-1, keepdims=True)
        var = jnp.mean((t - mu) ** 2, axis=-1, keepdims=True)
        return (t - mu) * jax.lax.rsqrt(var + eps) * g + beta

    def kernel(x_ref, wqkv_ref, bqkv_ref, wout_ref, bout_ref,
               w1_ref, b1_ref, w2_ref, b2_ref,
               g1_ref, be1_ref, g2_ref, be2_ref, o_ref):
        # x_ref: (S, B*E); batch b lives in lanes [b*E, (b+1)*E).
        xw = x_ref[...]
        # Gather to batch-major (B*S, E): 128-aligned lane slices + sublane
        # concat.  No transposes, no extra HBM traffic.
        x = jnp.concatenate([xw[:, b * E:(b + 1) * E] for b in range(B)],
                            axis=0)

        # ---- fused QKV projection: one big MXU matmul over all B*S tokens ---
        qkv = jnp.dot(x.astype(cdt), wqkv_ref[...],
                      preferred_element_type=jnp.float32) + bqkv_ref[...]
        q = qkv[:, :E] * scale                  # fold 1/sqrt(Dh) into q
        k = qkv[:, E:2 * E]
        v = qkv[:, 2 * E:]

        # ---- head split: stack per-(batch, head) slabs to (B*H, S, Dh) ------
        # Static lane/sublane slices + a leading-axis stack: pure relayout work
        # on the XLU/VPU, off the MXU critical chain.
        def to_heads(t):
            return jnp.stack(
                [t[b * S:(b + 1) * S, h * Dh:(h + 1) * Dh]
                 for b in range(B) for h in range(H)], axis=0).astype(cdt)

        qh, kh, vh = to_heads(q), to_heads(k), to_heads(v)     # (B*H, S, Dh)

        # ---- attention: batched MXU dots over all (batch, head) pairs -------
        # dot_general contracts Dh directly -> no explicit K transpose.
        logits = jnp.einsum('nqd,nkd->nqk', qh, kh,
                            preferred_element_type=jnp.float32)  # (B*H, S, S)

        # One softmax over the whole stacked array.
        logits = logits - jnp.max(logits, axis=-1, keepdims=True)
        p = jnp.exp(logits)
        denom = jnp.sum(p, axis=-1, keepdims=True)
        if approx_recip:
            p = p * pl.reciprocal(denom, approx=True)   # EUP slot, ~free
        else:
            p = p / denom

        ctx = jnp.einsum('nqk,nkd->nqd', p.astype(cdt), vh,
                         preferred_element_type=jnp.float32)     # (B*H, S, Dh)

        # ---- merge heads (lane concat) + ONE K=E output projection ----------
        merged = jnp.concatenate(
            [jnp.concatenate([ctx[b * H + h] for h in range(H)], axis=-1)
             for b in range(B)], axis=0)                         # (B*S, E)
        attn = jnp.dot(merged.astype(cdt), wout_ref[...],
                       preferred_element_type=jnp.float32) + bout_ref[...]

        # ---- residual + LayerNorm1 (f32) -------------------------------------
        y = layer_norm(x + attn, g1_ref[...], be1_ref[...])

        # ---- feed-forward: two big MXU matmuls --------------------------------
        hdn = jnp.dot(y.astype(cdt), w1_ref[...],
                      preferred_element_type=jnp.float32) + b1_ref[...]
        hdn = jnp.maximum(hdn, 0.0)
        ffn = jnp.dot(hdn.astype(cdt), w2_ref[...],
                      preferred_element_type=jnp.float32) + b2_ref[...]

        # ---- residual + LayerNorm2 (f32) -------------------------------------
        out = layer_norm(y + ffn, g2_ref[...], be2_ref[...])     # (B*S, E)

        # Scatter batch rows back to 128-aligned lane blocks (unmasked stores).
        for b in range(B):
            o_ref[:, b * E:(b + 1) * E] = out[b * S:(b + 1) * S].astype(o_ref.dtype)

    return kernel


def transformer_layer(x_sbe, params, *, num_heads,
                      compute_dtype=jnp.bfloat16, approx_recip=True):
    """x_sbe: (seq, batch, embed) float32, returns the same shape."""
    S, B, E = x_sbe.shape
    H = num_heads
    dff = params["w1"].shape[1]
    assert E % H == 0
    Dh = E // H

    # Free reshape (no transpose): batch b occupies lanes [b*E, (b+1)*E).
    x2d = x_sbe.reshape(S, B * E)

    # Matmul weights in the MXU compute dtype (bf16 halves weight DMA/VMEM);
    # biases and LayerNorm parameters stay f32.
    wqkv = params["wqkv"].astype(compute_dtype)
    wout = params["wout"].astype(compute_dtype)
    w1 = params["w1"].astype(compute_dtype)
    w2 = params["w2"].astype(compute_dtype)

    args = (x2d, wqkv, params["bqkv"], wout, params["bout"],
            w1, params["b1"], w2, params["b2"],
            params["g1"], params["be1"], params["g2"], params["be2"])

    # Scoped-VMEM budget from the actual operand footprint, capped against the
    # *physical* VMEM of the chip (v7x: 64 MiB/core -> request <= ~75% of it).
    io_bytes = sum(int(a.size) * a.dtype.itemsize for a in args) + S * B * E * 4
    try:
        phys_vmem = int(getattr(pltpu.get_tpu_info(), "vmem_capacity_bytes",
                                64 << 20))
    except Exception:  # interpreter / non-TPU fallback
        phys_vmem = 64 << 20
    vmem_limit = int(min(max(6 * io_bytes, 16 << 20), (3 * phys_vmem) // 4))

    # Advisory cost hint so XLA can schedule surrounding ops around the call.
    flops = (2 * B * S * (3 * E * E + E * E + 2 * E * dff)
             + 2 * 2 * B * H * S * S * Dh)
    cost = pl.CostEstimate(flops=int(flops),
                           transcendentals=int(B * H * S * S),
                           bytes_accessed=int(io_bytes))

    vmem = pl.BlockSpec(memory_space=pltpu.MemorySpace.VMEM)
    kernel = _make_kernel(S, B, E, H, dff, compute_dtype, approx_recip)

    out2d = pl.pallas_call(
        kernel,
        out_shape=jax.ShapeDtypeStruct((S, B * E), jnp.float32),
        in_specs=[vmem] * len(args),
        out_specs=vmem,
        input_output_aliases={0: 0},   # x2d and output share shape/dtype
        compiler_params=pltpu.CompilerParams(vmem_limit_bytes=vmem_limit),
        cost_estimate=cost,
    )(*args)

    return out2d.reshape(S, B, E)


def reference(x_sbe, params, *, num_heads):
    """Pure-JAX reference mirroring PyTorch TransformerLayer.forward (eval mode)."""
    S, B, E = x_sbe.shape
    Dh = E // num_heads
    scale = 1.0 / math.sqrt(Dh)
    eps = 1e-5
    x = jnp.transpose(x_sbe, (1, 0, 2))  # (B, S, E)

    qkv = x @ params["wqkv"] + params["bqkv"][0]
    q, k, v = qkv[..., :E], qkv[..., E:2 * E], qkv[..., 2 * E:]

    def split_heads(t):  # (B,S,E) -> (B,H,S,Dh)
        return jnp.transpose(t.reshape(B, S, num_heads, Dh), (0, 2, 1, 3))

    qh, kh, vh = split_heads(q), split_heads(k), split_heads(v)
    scores = jnp.einsum("bhqd,bhkd->bhqk", qh, kh) * scale
    p = jax.nn.softmax(scores, axis=-1)
    attn = jnp.einsum("bhqk,bhkd->bhqd", p, vh)
    attn = jnp.transpose(attn, (0, 2, 1, 3)).reshape(B, S, E)
    attn = attn @ params["wout"] + params["bout"][0]

    def ln(t, g, b):
        mu = jnp.mean(t, -1, keepdims=True)
        var = jnp.mean((t - mu) ** 2, -1, keepdims=True)
        return (t - mu) * jax.lax.rsqrt(var + eps) * g[0] + b[0]

    x1 = ln(x + attn, params["g1"], params["be1"])
    ffn = jnp.maximum(x1 @ params["w1"] + params["b1"][0], 0.0) @ params["w2"] + params["b2"][0]
    x2 = ln(x1 + ffn, params["g2"], params["be2"])
    return jnp.transpose(x2, (1, 0, 2))


def init_params(key, embed_dim, dff):
    keys = jax.random.split(key, 10)
    std = 0.05
    # Weights are stored pre-transposed (input_dim, output_dim) so the kernel
    # can do x @ W directly (PyTorch Linear does x @ W.T).
    return {
        "wqkv": jax.random.normal(keys[0], (embed_dim, 3 * embed_dim), jnp.float32) * std,
        "bqkv": jax.random.normal(keys[1], (1, 3 * embed_dim), jnp.float32) * std,
        "wout": jax.random.normal(keys[2], (embed_dim, embed_dim), jnp.float32) * std,
        "bout": jax.random.normal(keys[3], (1, embed_dim), jnp.float32) * std,
        "w1": jax.random.normal(keys[4], (embed_dim, dff), jnp.float32) * std,
        "b1": jax.random.normal(keys[5], (1, dff), jnp.float32) * std,
        "w2": jax.random.normal(keys[6], (dff, embed_dim), jnp.float32) * std,
        "b2": jax.random.normal(keys[7], (1, embed_dim), jnp.float32) * std,
        "g1": 1.0 + 0.1 * jax.random.normal(keys[8], (1, embed_dim), jnp.float32),
        "be1": jnp.zeros((1, embed_dim), jnp.float32) + 0.01,
        "g2": 1.0 + 0.1 * jax.random.normal(keys[9], (1, embed_dim), jnp.float32),
        "be2": jnp.zeros((1, embed_dim), jnp.float32) - 0.01,
    }


if __name__ == "__main__":
    # Small but lane-dense shapes: E and dff are multiples of 128 so every
    # matmul operand / output and every store is unmasked and MXU-friendly.
    seq_len, batch, embed_dim, num_heads, dff = 16, 2, 128, 4, 256

    key = jax.random.PRNGKey(0)
    kx, kp = jax.random.split(key)
    x = jax.random.normal(kx, (seq_len, batch, embed_dim), jnp.float32)
    params = init_params(kp, embed_dim, dff)

    ref = jax.block_until_ready(reference(x, params, num_heads=num_heads))

    # Exact path (f32 matmul inputs, exact divide): strict semantics check.
    out_f32 = jax.block_until_ready(
        transformer_layer(x, params, num_heads=num_heads,
                          compute_dtype=jnp.float32, approx_recip=False))
    assert out_f32.shape == (seq_len, batch, embed_dim)
    assert jnp.allclose(out_f32, ref, atol=2e-4, rtol=2e-4), "f32 kernel mismatch vs reference"

    # Default fast path (bf16 MXU inputs, f32 accumulation, approx reciprocal).
    out_bf16 = jax.block_until_ready(
        transformer_layer(x, params, num_heads=num_heads))
    assert out_bf16.shape == (seq_len, batch, embed_dim)
    assert jnp.allclose(out_bf16, ref, atol=5e-2, rtol=5e-2), "bf16 kernel mismatch vs reference"

    print("KERNEL_OK")
</pallas_src>

<mosaic_0001>
module attributes {stable_mosaic.version = 11 : i64} {
  func.func @kernel(%arg0: memref<16x256xf32, #tpu.memory_space<vmem>>, %arg1: memref<128x384xf32, #tpu.memory_space<vmem>>, %arg2: memref<1x384xf32, #tpu.memory_space<vmem>>, %arg3: memref<128x128xf32, #tpu.memory_space<vmem>>, %arg4: memref<1x128xf32, #tpu.memory_space<vmem>>, %arg5: memref<128x256xf32, #tpu.memory_space<vmem>>, %arg6: memref<1x256xf32, #tpu.memory_space<vmem>>, %arg7: memref<256x128xf32, #tpu.memory_space<vmem>>, %arg8: memref<1x128xf32, #tpu.memory_space<vmem>>, %arg9: memref<1x128xf32, #tpu.memory_space<vmem>>, %arg10: memref<1x128xf32, #tpu.memory_space<vmem>>, %arg11: memref<1x128xf32, #tpu.memory_space<vmem>>, %arg12: memref<1x128xf32, #tpu.memory_space<vmem>>, %arg13: memref<16x256xf32, #tpu.memory_space<vmem>>) attributes {dimension_semantics = [], scalar_prefetch = 0 : i64, scratch_operands = 0 : i64, tpu.core_type = #tpu.core_type<tc>} {
    %c0 = arith.constant 0 : index
    %c0_0 = arith.constant 0 : index
    %0 = vector.load %arg0[%c0, %c0_0] : memref<16x256xf32, #tpu.memory_space<vmem>>, vector<16x256xf32>
    %1 = vector.extract_strided_slice %0 {offsets = [0, 0], sizes = [16, 128], strides = [1, 1]} : vector<16x256xf32> to vector<16x128xf32>
    %2 = vector.extract_strided_slice %0 {offsets = [0, 128], sizes = [16, 128], strides = [1, 1]} : vector<16x256xf32> to vector<16x128xf32>
    %3 = tpu.concatenate %1, %2 in 0 : vector<16x128xf32>, vector<16x128xf32> -> vector<32x128xf32>
    %c0_1 = arith.constant 0 : index
    %c0_2 = arith.constant 0 : index
    %4 = vector.load %arg1[%c0_1, %c0_2] : memref<128x384xf32, #tpu.memory_space<vmem>>, vector<128x384xf32>
    %cst = arith.constant dense<0.000000e+00> : vector<32x384xf32>
    %5 = tpu.matmul %3, %4, %cst {dimension_numbers = #tpu.dot_dimension_numbers<[1], [0], [0], [1], [0, 0, 1, 1], [], []>} : vector<32x128xf32>, vector<128x384xf32>, vector<32x384xf32> -> vector<32x384xf32>
    %c0_3 = arith.constant 0 : index
    %c0_4 = arith.constant 0 : index
    %6 = vector.load %arg2[%c0_3, %c0_4] : memref<1x384xf32, #tpu.memory_space<vmem>>, vector<1x384xf32>
    %7 = vector.broadcast %6 : vector<1x384xf32> to vector<32x384xf32>
    %8 = arith.addf %5, %7 : vector<32x384xf32>
    %9 = vector.extract_strided_slice %8 {offsets = [0, 0], sizes = [32, 128], strides = [1, 1]} : vector<32x384xf32> to vector<32x128xf32>
    %cst_5 = arith.constant 0.176776692 : f32
    %10 = vector.broadcast %cst_5 : f32 to vector<32x128xf32>
    %11 = arith.mulf %9, %10 : vector<32x128xf32>
    %12 = vector.extract_strided_slice %8 {offsets = [0, 128], sizes = [32, 128], strides = [1, 1]} : vector<32x384xf32> to vector<32x128xf32>
    %13 = vector.extract_strided_slice %8 {offsets = [0, 256], sizes = [32, 128], strides = [1, 1]} : vector<32x384xf32> to vector<32x128xf32>
    %14 = vector.extract_strided_slice %11 {offsets = [0, 0], sizes = [16, 32], strides = [1, 1]} : vector<32x128xf32> to vector<16x32xf32>
    %15 = vector.extract_strided_slice %11 {offsets = [0, 32], sizes = [16, 32], strides = [1, 1]} : vector<32x128xf32> to vector<16x32xf32>
    %16 = vector.extract_strided_slice %11 {offsets = [0, 64], sizes = [16, 32], strides = [1, 1]} : vector<32x128xf32> to vector<16x32xf32>
    %17 = vector.extract_strided_slice %11 {offsets = [0, 96], sizes = [16, 32], strides = [1, 1]} : vector<32x128xf32> to vector<16x32xf32>
    %18 = vector.extract_strided_slice %11 {offsets = [16, 0], sizes = [16, 32], strides = [1, 1]} : vector<32x128xf32> to vector<16x32xf32>
    %19 = vector.extract_strided_slice %11 {offsets = [16, 32], sizes = [16, 32], strides = [1, 1]} : vector<32x128xf32> to vector<16x32xf32>
    %20 = vector.extract_strided_slice %11 {offsets = [16, 64], sizes = [16, 32], strides = [1, 1]} : vector<32x128xf32> to vector<16x32xf32>
    %21 = vector.extract_strided_slice %11 {offsets = [16, 96], sizes = [16, 32], strides = [1, 1]} : vector<32x128xf32> to vector<16x32xf32>
    %22 = vector.shape_cast %14 : vector<16x32xf32> to vector<1x16x32xf32>
    %23 = vector.shape_cast %15 : vector<16x32xf32> to vector<1x16x32xf32>
    %24 = vector.shape_cast %16 : vector<16x32xf32> to vector<1x16x32xf32>
    %25 = vector.shape_cast %17 : vector<16x32xf32> to vector<1x16x32xf32>
    %26 = vector.shape_cast %18 : vector<16x32xf32> to vector<1x16x32xf32>
    %27 = vector.shape_cast %19 : vector<16x32xf32> to vector<1x16x32xf32>
    %28 = vector.shape_cast %20 : vector<16x32xf32> to vector<1x16x32xf32>
    %29 = vector.shape_cast %21 : vector<16x32xf32> to vector<1x16x32xf32>
    %30 = tpu.concatenate %22, %23, %24, %25, %26, %27, %28, %29 in 0 : vector<1x16x32xf32>, vector<1x16x32xf32>, vector<1x16x32xf32>, vector<1x16x32xf32>, vector<1x16x32xf32>, vector<1x16x32xf32>, vector<1x16x32xf32>, vector<1x16x32xf32> -> vector<8x16x32xf32>
    %31 = vector.extract_strided_slice %12 {offsets = [0, 0], sizes = [16, 32], strides = [1, 1]} : vector<32x128xf32> to vector<16x32xf32>
    %32 = vector.extract_strided_slice %12 {offsets = [0, 32], sizes = [16, 32], strides = [1, 1]} : vector<32x128xf32> to vector<16x32xf32>
    %33 = vector.extract_strided_slice %12 {offsets = [0, 64], sizes = [16, 32], strides = [1, 1]} : vector<32x128xf32> to vector<16x32xf32>
    %34 = vector.extract_strided_slice %12 {offsets = [0, 96], sizes = [16, 32], strides = [1, 1]} : vector<32x128xf32> to vector<16x32xf32>
    %35 = vector.extract_strided_slice %12 {offsets = [16, 0], sizes = [16, 32], strides = [1, 1]} : vector<32x128xf32> to vector<16x32xf32>
    %36 = vector.extract_strided_slice %12 {offsets = [16, 32], sizes = [16, 32], strides = [1, 1]} : vector<32x128xf32> to vector<16x32xf32>
    %37 = vector.extract_strided_slice %12 {offsets = [16, 64], sizes = [16, 32], strides = [1, 1]} : vector<32x128xf32> to vector<16x32xf32>
    %38 = vector.extract_strided_slice %12 {offsets = [16, 96], sizes = [16, 32], strides = [1, 1]} : vector<32x128xf32> to vector<16x32xf32>
    %39 = vector.shape_cast %31 : vector<16x32xf32> to vector<1x16x32xf32>
    %40 = vector.shape_cast %32 : vector<16x32xf32> to vector<1x16x32xf32>
    %41 = vector.shape_cast %33 : vector<16x32xf32> to vector<1x16x32xf32>
    %42 = vector.shape_cast %34 : vector<16x32xf32> to vector<1x16x32xf32>
    %43 = vector.shape_cast %35 : vector<16x32xf32> to vector<1x16x32xf32>
    %44 = vector.shape_cast %36 : vector<16x32xf32> to vector<1x16x32xf32>
    %45 = vector.shape_cast %37 : vector<16x32xf32> to vector<1x16x32xf32>
    %46 = vector.shape_cast %38 : vector<16x32xf32> to vector<1x16x32xf32>
    %47 = tpu.concatenate %39, %40, %41, %42, %43, %44, %45, %46 in 0 : vector<1x16x32xf32>, vector<1x16x32xf32>, vector<1x16x32xf32>, vector<1x16x32xf32>, vector<1x16x32xf32>, vector<1x16x32xf32>, vector<1x16x32xf32>, vector<1x16x32xf32> -> vector<8x16x32xf32>
    %48 = vector.extract_strided_slice %13 {offsets = [0, 0], sizes = [16, 32], strides = [1, 1]} : vector<32x128xf32> to vector<16x32xf32>
    %49 = vector.extract_strided_slice %13 {offsets = [0, 32], sizes = [16, 32], strides = [1, 1]} : vector<32x128xf32> to vector<16x32xf32>
    %50 = vector.extract_strided_slice %13 {offsets = [0, 64], sizes = [16, 32], strides = [1, 1]} : vector<32x128xf32> to vector<16x32xf32>
    %51 = vector.extract_strided_slice %13 {offsets = [0, 96], sizes = [16, 32], strides = [1, 1]} : vector<32x128xf32> to vector<16x32xf32>
    %52 = vector.extract_strided_slice %13 {offsets = [16, 0], sizes = [16, 32], strides = [1, 1]} : vector<32x128xf32> to vector<16x32xf32>
    %53 = vector.extract_strided_slice %13 {offsets = [16, 32], sizes = [16, 32], strides = [1, 1]} : vector<32x128xf32> to vector<16x32xf32>
    %54 = vector.extract_strided_slice %13 {offsets = [16, 64], sizes = [16, 32], strides = [1, 1]} : vector<32x128xf32> to vector<16x32xf32>
    %55 = vector.extract_strided_slice %13 {offsets = [16, 96], sizes = [16, 32], strides = [1, 1]} : vector<32x128xf32> to vector<16x32xf32>
    %56 = vector.shape_cast %48 : vector<16x32xf32> to vector<1x16x32xf32>
    %57 = vector.shape_cast %49 : vector<16x32xf32> to vector<1x16x32xf32>
    %58 = vector.shape_cast %50 : vector<16x32xf32> to vector<1x16x32xf32>
    %59 = vector.shape_cast %51 : vector<16x32xf32> to vector<1x16x32xf32>
    %60 = vector.shape_cast %52 : vector<16x32xf32> to vector<1x16x32xf32>
    %61 = vector.shape_cast %53 : vector<16x32xf32> to vector<1x16x32xf32>
    %62 = vector.shape_cast %54 : vector<16x32xf32> to vector<1x16x32xf32>
    %63 = vector.shape_cast %55 : vector<16x32xf32> to vector<1x16x32xf32>
    %64 = tpu.concatenate %56, %57, %58, %59, %60, %61, %62, %63 in 0 : vector<1x16x32xf32>, vector<1x16x32xf32>, vector<1x16x32xf32>, vector<1x16x32xf32>, vector<1x16x32xf32>, vector<1x16x32xf32>, vector<1x16x32xf32>, vector<1x16x32xf32> -> vector<8x16x32xf32>
    "tpu.trace_start"() <{level = 10 : i32, message = "nqd,nkd->nqk"}> : () -> ()
    %cst_6 = arith.constant dense<0.000000e+00> : vector<8x16x16xf32>
    %65 = tpu.matmul %30, %47, %cst_6 {dimension_numbers = #tpu.dot_dimension_numbers<[2], [2], [1], [1], [0, 0, 0, 1, 1, 1], [0], [0]>} : vector<8x16x32xf32>, vector<8x16x32xf32>, vector<8x16x16xf32> -> vector<8x16x16xf32>
    "tpu.trace_stop"() : () -> ()
    %cst_7 = arith.constant dense<0xFF800000> : vector<8x16xf32>
    %66 = vector.multi_reduction <maximumf>, %65, %cst_7 [2] : vector<8x16x16xf32> to vector<8x16xf32>
    %67 = vector.shape_cast %66 : vector<8x16xf32> to vector<8x16x1xf32>
    %68 = vector.broadcast %67 : vector<8x16x1xf32> to vector<8x16x16xf32>
    %69 = arith.subf %65, %68 : vector<8x16x16xf32>
    %70 = math.exp %69 : vector<8x16x16xf32>
    %cst_8 = arith.constant dense<0.000000e+00> : vector<8x16xf32>
    %71 = vector.multi_reduction <add>, %70, %cst_8 [2] : vector<8x16x16xf32> to vector<8x16xf32>
    %72 = vector.shape_cast %71 : vector<8x16xf32> to vector<8x16x1xf32>
    %73 = vector.broadcast %72 : vector<8x16x1xf32> to vector<8x16x16xf32>
    %74 = arith.divf %70, %73 : vector<8x16x16xf32>
    "tpu.trace_start"() <{level = 10 : i32, message = "nqk,nkd->nqd"}> : () -> ()
    %cst_9 = arith.constant dense<0.000000e+00> : vector<8x16x32xf32>
    %75 = tpu.matmul %74, %64, %cst_9 {dimension_numbers = #tpu.dot_dimension_numbers<[2], [1], [1], [2], [0, 0, 0, 1, 1, 2], [0], [0]>} : vector<8x16x16xf32>, vector<8x16x32xf32>, vector<8x16x32xf32> -> vector<8x16x32xf32>
    "tpu.trace_stop"() : () -> ()
    %76 = vector.extract_strided_slice %75 {offsets = [0, 0, 0], sizes = [1, 16, 32], strides = [1, 1, 1]} : vector<8x16x32xf32> to vector<1x16x32xf32>
    %77 = vector.shape_cast %76 : vector<1x16x32xf32> to vector<16x32xf32>
    %78 = vector.extract_strided_slice %75 {offsets = [1, 0, 0], sizes = [1, 16, 32], strides = [1, 1, 1]} : vector<8x16x32xf32> to vector<1x16x32xf32>
    %79 = vector.shape_cast %78 : vector<1x16x32xf32> to vector<16x32xf32>
    %80 = vector.extract_strided_slice %75 {offsets = [2, 0, 0], sizes = [1, 16, 32], strides = [1, 1, 1]} : vector<8x16x32xf32> to vector<1x16x32xf32>
    %81 = vector.shape_cast %80 : vector<1x16x32xf32> to vector<16x32xf32>
    %82 = vector.extract_strided_slice %75 {offsets = [3, 0, 0], sizes = [1, 16, 32], strides = [1, 1, 1]} : vector<8x16x32xf32> to vector<1x16x32xf32>
    %83 = vector.shape_cast %82 : vector<1x16x32xf32> to vector<16x32xf32>
    %84 = tpu.concatenate %77, %79, %81, %83 in 1 : vector<16x32xf32>, vector<16x32xf32>, vector<16x32xf32>, vector<16x32xf32> -> vector<16x128xf32>
    %85 = vector.extract_strided_slice %75 {offsets = [4, 0, 0], sizes = [1, 16, 32], strides = [1, 1, 1]} : vector<8x16x32xf32> to vector<1x16x32xf32>
    %86 = vector.shape_cast %85 : vector<1x16x32xf32> to vector<16x32xf32>
    %87 = vector.extract_strided_slice %75 {offsets = [5, 0, 0], sizes = [1, 16, 32], strides = [1, 1, 1]} : vector<8x16x32xf32> to vector<1x16x32xf32>
    %88 = vector.shape_cast %87 : vector<1x16x32xf32> to vector<16x32xf32>
    %89 = vector.extract_strided_slice %75 {offsets = [6, 0, 0], sizes = [1, 16, 32], strides = [1, 1, 1]} : vector<8x16x32xf32> to vector<1x16x32xf32>
    %90 = vector.shape_cast %89 : vector<1x16x32xf32> to vector<16x32xf32>
    %91 = vector.extract_strided_slice %75 {offsets = [7, 0, 0], sizes = [1, 16, 32], strides = [1, 1, 1]} : vector<8x16x32xf32> to vector<1x16x32xf32>
    %92 = vector.shape_cast %91 : vector<1x16x32xf32> to vector<16x32xf32>
    %93 = tpu.concatenate %86, %88, %90, %92 in 1 : vector<16x32xf32>, vector<16x32xf32>, vector<16x32xf32>, vector<16x32xf32> -> vector<16x128xf32>
    %94 = tpu.concatenate %84, %93 in 0 : vector<16x128xf32>, vector<16x128xf32> -> vector<32x128xf32>
    %c0_10 = arith.constant 0 : index
    %c0_11 = arith.constant 0 : index
    %95 = vector.load %arg3[%c0_10, %c0_11] : memref<128x128xf32, #tpu.memory_space<vmem>>, vector<128x128xf32>
    %cst_12 = arith.constant dense<0.000000e+00> : vector<32x128xf32>
    %96 = tpu.matmul %94, %95, %cst_12 {dimension_numbers = #tpu.dot_dimension_numbers<[1], [0], [0], [1], [0, 0, 1, 1], [], []>} : vector<32x128xf32>, vector<128x128xf32>, vector<32x128xf32> -> vector<32x128xf32>
    %c0_13 = arith.constant 0 : index
    %c0_14 = arith.constant 0 : index
    %97 = vector.load %arg4[%c0_13, %c0_14] : memref<1x128xf32, #tpu.memory_space<vmem>>, vector<1x128xf32>
    %98 = vector.broadcast %97 : vector<1x128xf32> to vector<32x128xf32>
    %99 = arith.addf %96, %98 : vector<32x128xf32>
    %100 = arith.addf %3, %99 : vector<32x128xf32>
    %c0_15 = arith.constant 0 : index
    %c0_16 = arith.constant 0 : index
    %101 = vector.load %arg9[%c0_15, %c0_16] : memref<1x128xf32, #tpu.memory_space<vmem>>, vector<1x128xf32>
    %c0_17 = arith.constant 0 : index
    %c0_18 = arith.constant 0 : index
    %102 = vector.load %arg10[%c0_17, %c0_18] : memref<1x128xf32, #tpu.memory_space<vmem>>, vector<1x128xf32>
    %cst_19 = arith.constant dense<0.000000e+00> : vector<32xf32>
    %103 = vector.multi_reduction <add>, %100, %cst_19 [1] : vector<32x128xf32> to vector<32xf32>
    %104 = vector.shape_cast %103 : vector<32xf32> to vector<32x1xf32>
    %cst_20 = arith.constant 1.280000e+02 : f32
    %105 = vector.broadcast %cst_20 : f32 to vector<32x1xf32>
    %106 = arith.divf %104, %105 : vector<32x1xf32>
    %107 = vector.broadcast %106 : vector<32x1xf32> to vector<32x128xf32>
    %108 = arith.subf %100, %107 : vector<32x128xf32>
    %109 = arith.mulf %108, %108 : vector<32x128xf32>
    %cst_21 = arith.constant dense<0.000000e+00> : vector<32xf32>
    %110 = vector.multi_reduction <add>, %109, %cst_21 [1] : vector<32x128xf32> to vector<32xf32>
    %111 = vector.shape_cast %110 : vector<32xf32> to vector<32x1xf32>
    %cst_22 = arith.constant 1.280000e+02 : f32
    %112 = vector.broadcast %cst_22 : f32 to vector<32x1xf32>
    %113 = arith.divf %111, %112 : vector<32x1xf32>
    %114 = vector.broadcast %106 : vector<32x1xf32> to vector<32x128xf32>
    %115 = arith.subf %100, %114 : vector<32x128xf32>
    %cst_23 = arith.constant 9.99999974E-6 : f32
    %116 = vector.broadcast %cst_23 : f32 to vector<32x1xf32>
    %117 = arith.addf %113, %116 : vector<32x1xf32>
    %118 = math.rsqrt %117 : vector<32x1xf32>
    %119 = vector.broadcast %118 : vector<32x1xf32> to vector<32x128xf32>
    %120 = arith.mulf %115, %119 : vector<32x128xf32>
    %121 = vector.broadcast %101 : vector<1x128xf32> to vector<32x128xf32>
    %122 = arith.mulf %120, %121 : vector<32x128xf32>
    %123 = vector.broadcast %102 : vector<1x128xf32> to vector<32x128xf32>
    %124 = arith.addf %122, %123 : vector<32x128xf32>
    %c0_24 = arith.constant 0 : index
    %c0_25 = arith.constant 0 : index
    %125 = vector.load %arg5[%c0_24, %c0_25] : memref<128x256xf32, #tpu.memory_space<vmem>>, vector<128x256xf32>
    %cst_26 = arith.constant dense<0.000000e+00> : vector<32x256xf32>
    %126 = tpu.matmul %124, %125, %cst_26 {dimension_numbers = #tpu.dot_dimension_numbers<[1], [0], [0], [1], [0, 0, 1, 1], [], []>} : vector<32x128xf32>, vector<128x256xf32>, vector<32x256xf32> -> vector<32x256xf32>
    %c0_27 = arith.constant 0 : index
    %c0_28 = arith.constant 0 : index
    %127 = vector.load %arg6[%c0_27, %c0_28] : memref<1x256xf32, #tpu.memory_space<vmem>>, vector<1x256xf32>
    %128 = vector.broadcast %127 : vector<1x256xf32> to vector<32x256xf32>
    %129 = arith.addf %126, %128 : vector<32x256xf32>
    %cst_29 = arith.constant 0.000000e+00 : f32
    %130 = vector.broadcast %cst_29 : f32 to vector<32x256xf32>
    %131 = arith.maximumf %129, %130 : vector<32x256xf32>
    %c0_30 = arith.constant 0 : index
    %c0_31 = arith.constant 0 : index
    %132 = vector.load %arg7[%c0_30, %c0_31] : memref<256x128xf32, #tpu.memory_space<vmem>>, vector<256x128xf32>
    %cst_32 = arith.constant dense<0.000000e+00> : vector<32x128xf32>
    %133 = tpu.matmul %131, %132, %cst_32 {dimension_numbers = #tpu.dot_dimension_numbers<[1], [0], [0], [1], [0, 0, 1, 1], [], []>} : vector<32x256xf32>, vector<256x128xf32>, vector<32x128xf32> -> vector<32x128xf32>
    %c0_33 = arith.constant 0 : index
    %c0_34 = arith.constant 0 : index
    %134 = vector.load %arg8[%c0_33, %c0_34] : memref<1x128xf32, #tpu.memory_space<vmem>>, vector<1x128xf32>
    %135 = vector.broadcast %134 : vector<1x128xf32> to vector<32x128xf32>
    %136 = arith.addf %133, %135 : vector<32x128xf32>
    %137 = arith.addf %124, %136 : vector<32x128xf32>
    %c0_35 = arith.constant 0 : index
    %c0_36 = arith.constant 0 : index
    %138 = vector.load %arg11[%c0_35, %c0_36] : memref<1x128xf32, #tpu.memory_space<vmem>>, vector<1x128xf32>
    %c0_37 = arith.constant 0 : index
    %c0_38 = arith.constant 0 : index
    %139 = vector.load %arg12[%c0_37, %c0_38] : memref<1x128xf32, #tpu.memory_space<vmem>>, vector<1x128xf32>
    %cst_39 = arith.constant dense<0.000000e+00> : vector<32xf32>
    %140 = vector.multi_reduction <add>, %137, %cst_39 [1] : vector<32x128xf32> to vector<32xf32>
    %141 = vector.shape_cast %140 : vector<32xf32> to vector<32x1xf32>
    %cst_40 = arith.constant 1.280000e+02 : f32
    %142 = vector.broadcast %cst_40 : f32 to vector<32x1xf32>
    %143 = arith.divf %141, %142 : vector<32x1xf32>
    %144 = vector.broadcast %143 : vector<32x1xf32> to vector<32x128xf32>
    %145 = arith.subf %137, %144 : vector<32x128xf32>
    %146 = arith.mulf %145, %145 : vector<32x128xf32>
    %cst_41 = arith.constant dense<0.000000e+00> : vector<32xf32>
    %147 = vector.multi_reduction <add>, %146, %cst_41 [1] : vector<32x128xf32> to vector<32xf32>
    %148 = vector.shape_cast %147 : vector<32xf32> to vector<32x1xf32>
    %cst_42 = arith.constant 1.280000e+02 : f32
    %149 = vector.broadcast %cst_42 : f32 to vector<32x1xf32>
    %150 = arith.divf %148, %149 : vector<32x1xf32>
    %151 = vector.broadcast %143 : vector<32x1xf32> to vector<32x128xf32>
    %152 = arith.subf %137, %151 : vector<32x128xf32>
    %cst_43 = arith.constant 9.99999974E-6 : f32
    %153 = vector.broadcast %cst_43 : f32 to vector<32x1xf32>
    %154 = arith.addf %150, %153 : vector<32x1xf32>
    %155 = math.rsqrt %154 : vector<32x1xf32>
    %156 = vector.broadcast %155 : vector<32x1xf32> to vector<32x128xf32>
    %157 = arith.mulf %152, %156 : vector<32x128xf32>
    %158 = vector.broadcast %138 : vector<1x128xf32> to vector<32x128xf32>
    %159 = arith.mulf %157, %158 : vector<32x128xf32>
    %160 = vector.broadcast %139 : vector<1x128xf32> to vector<32x128xf32>
    %161 = arith.addf %159, %160 : vector<32x128xf32>
    %162 = vector.extract_strided_slice %161 {offsets = [0, 0], sizes = [16, 128], strides = [1, 1]} : vector<32x128xf32> to vector<16x128xf32>
    %c0_44 = arith.constant 0 : index
    %c0_45 = arith.constant 0 : index
    %163 = vector.load %arg13[%c0_44, %c0_45] : memref<16x256xf32, #tpu.memory_space<vmem>>, vector<16x128xf32>
    tpu.vector_store %arg13[%c0_44, %c0_45], %162 {strides = array<i32>} : memref<16x256xf32, #tpu.memory_space<vmem>>, vector<16x128xf32>,
    %164 = vector.extract_strided_slice %161 {offsets = [16, 0], sizes = [16, 128], strides = [1, 1]} : vector<32x128xf32> to vector<16x128xf32>
    %c0_46 = arith.constant 0 : index
    %c128 = arith.constant 128 : index
    %165 = vector.load %arg13[%c0_46, %c128] : memref<16x256xf32, #tpu.memory_space<vmem>>, vector<16x128xf32>
    tpu.vector_store %arg13[%c0_46, %c128], %164 {strides = array<i32>} : memref<16x256xf32, #tpu.memory_space<vmem>>, vector<16x128xf32>,
    return
  }
}

</mosaic_0001>

<llo_original>
// kernel: tpu_custom_call.1
$region0: #{tpu_custom_call.1}
  #allocation0 [shape = 'u32[]', space=smem, size = 0x4, offset = 0x4, fixed_abs, tag = 'smem constant byte address 0x4 - core index']
  #allocation1 [shape = 'u32[72,128]{1,0:T(1,128)}', space=vmem, size = 0x9000, scoped, tag = 'internal scratch']
  %s0 = inlined_call_operand.hbm [shape: f32[16,256], index: 0, kind: input, shape index: {}, may-alias: {0,13}]
  %s1 = inlined_call_operand.hbm [shape: f32[128,384], index: 1, kind: input, shape index: {}]
  %s2 = inlined_call_operand.vmem [shape: f32[1,384], index: 2, kind: input, shape index: {}]
  %s3 = inlined_call_operand.hbm [shape: f32[128,128], index: 3, kind: input, shape index: {}]
  %s4 = inlined_call_operand.vmem [shape: f32[1,128], index: 4, kind: input, shape index: {}]
  %s5 = inlined_call_operand.hbm [shape: f32[128,256], index: 5, kind: input, shape index: {}]
  %s6 = inlined_call_operand.vmem [shape: f32[1,256], index: 6, kind: input, shape index: {}]
  %s7 = inlined_call_operand.hbm [shape: f32[256,128], index: 7, kind: input, shape index: {}]
  %s8 = inlined_call_operand.vmem [shape: f32[1,128], index: 8, kind: input, shape index: {}]
  %s9 = inlined_call_operand.vmem [shape: f32[1,128], index: 9, kind: input, shape index: {}]
  %s10 = inlined_call_operand.vmem [shape: f32[1,128], index: 10, kind: input, shape index: {}]
  %s11 = inlined_call_operand.vmem [shape: f32[1,128], index: 11, kind: input, shape index: {}]
  %s12 = inlined_call_operand.vmem [shape: f32[1,128], index: 12, kind: input, shape index: {}]
  %s13 = inlined_call_operand.hbm [shape: f32[16,256], index: 13, kind: output, shape index: {}, may-alias: {0,13}]
  %s14 = sld [smem:[#allocation0]]
  $region82: #{tpu_custom_call.1} parent=0
    _
  %s16 = ssub.s32 1, %s14
  %s17 = scalar_select 0, %s16, %s14
  $region1: #{tpu_custom_call.1} parent=0
    #allocation2 [shape = 'u8[16384]{0}', space=vmem, size = 0x4000, scoped, tag = 'input window, operand 0, single buffered']
    #allocation3 [shape = 's32[1]{0}', space=sflag, size = 0x4, scoped, tag = 'scoped memory for tpu_custom_call.1']
    #allocation4 [shape = 's32[1]{0}', space=sflag, size = 0x4, scoped, tag = 'scoped memory for tpu_custom_call.1']
    #allocation5 [shape = 'u8[196608]{0}', space=vmem, size = 0x30000, scoped, tag = 'input window, operand 1, single buffered']
    #allocation6 [shape = 's32[1]{0}', space=sflag, size = 0x4, scoped, tag = 'scoped memory for tpu_custom_call.1']
    #allocation7 [shape = 'u8[65536]{0}', space=vmem, size = 0x10000, scoped, tag = 'input window, operand 3, single buffered']
    #allocation8 [shape = 'u8[131072]{0}', space=vmem, size = 0x20000, scoped, tag = 'input window, operand 5, single buffered']
    #allocation9 [shape = 's32[1]{0}', space=sflag, size = 0x4, scoped, tag = 'scoped memory for tpu_custom_call.1']
    #allocation10 [shape = 'u8[131072]{0}', space=vmem, size = 0x20000, scoped, tag = 'input window, operand 7, single buffered']
    #allocation11 [shape = 'u8[16384]{0}', space=vmem, size = 0x4000, scoped, tag = 'output window, operand 0, single buffered']
    %18 = vsyncpa [#allocation3], 0
    %19 = vsyncpa [#allocation6], 0
    %20 = vsyncpa [#allocation9], 0
    %21 = vsyncpa [#allocation4], 0
    // Predicated region
    $region2: #{tpu_custom_call.1} parent=1 // pred_check
      _
    $region3: #{tpu_custom_call.1} parent=1 // pred_check_branch
      %23 = sbr.rel (0) target = $region5
    $region4: #{tpu_custom_call.1} parent=1 // pred_region
      %25 = vsyncadd [#allocation3], 0
      %s26 = sshll.u32 %s0, 4
      %s27 = int_to_ptr.hbm [resolvable:$true] %s26
      %s28 = sshll.u32 [#allocation2], 4
      %s29 = int_to_ptr.vmem [resolvable:$true] %s28
      %34 = dma.hbm_to_vmem [thread:$0]  %s27, 512, %s29, [#allocation3], 256, 256, 16
    $region5: #{tpu_custom_call.1} parent=1 // pred_fallthru
      _
    // Predicated region
    $region6: #{tpu_custom_call.1} parent=1 // pred_check
      _
    $region7: #{tpu_custom_call.1} parent=1 // pred_check_branch
      %36 = sbr.rel (0) target = $region9
    $region8: #{tpu_custom_call.1} parent=1 // pred_region
      %38 = vsyncadd [#allocation6], 0
      %s39 = sshll.u32 %s1, 4
      %s40 = int_to_ptr.hbm [resolvable:$true] %s39
      %s41 = sshll.u32 [#allocation5], 4
      %s42 = int_to_ptr.vmem [resolvable:$true] %s41
      %47 = dma.hbm_to_vmem [thread:$0]  %s40, 6144, %s42, [#allocation6], 384, 384, 24
    $region9: #{tpu_custom_call.1} parent=1 // pred_fallthru
      _
    // Predicated region
    $region10: #{tpu_custom_call.1} parent=1 // pred_check
      _
    $region11: #{tpu_custom_call.1} parent=1 // pred_check_branch
      %49 = sbr.rel (0) target = $region13
    $region12: #{tpu_custom_call.1} parent=1 // pred_region
      _
    $region13: #{tpu_custom_call.1} parent=1 // pred_fallthru
      _
    // Predicated region
    $region14: #{tpu_custom_call.1} parent=1 // pred_check
      _
    $region15: #{tpu_custom_call.1} parent=1 // pred_check_branch
      %51 = sbr.rel (0) target = $region17
    $region16: #{tpu_custom_call.1} parent=1 // pred_region
      %53 = vsyncadd [#allocation6], 0
      %s54 = sshll.u32 %s3, 4
      %s55 = int_to_ptr.hbm [resolvable:$true] %s54
      %s56 = sshll.u32 [#allocation7], 4
      %s57 = int_to_ptr.vmem [resolvable:$true] %s56
      %62 = dma.hbm_to_vmem [thread:$0]  %s55, 2048, %s57, [#allocation6], 128, 128, 8
    $region17: #{tpu_custom_call.1} parent=1 // pred_fallthru
      _
    // Predicated region
    $region18: #{tpu_custom_call.1} parent=1 // pred_check
      _
    $region19: #{tpu_custom_call.1} parent=1 // pred_check_branch
      %64 = sbr.rel (0) target = $region21
    $region20: #{tpu_custom_call.1} parent=1 // pred_region
      _
    $region21: #{tpu_custom_call.1} parent=1 // pred_fallthru
      _
    // Predicated region
    $region22: #{tpu_custom_call.1} parent=1 // pred_check
      _
    $region23: #{tpu_custom_call.1} parent=1 // pred_check_branch
      %66 = sbr.rel (0) target = $region25
    $region24: #{tpu_custom_call.1} parent=1 // pred_region
      %68 = vsyncadd [#allocation9], 0
      %s69 = sshll.u32 %s5, 4
      %s70 = int_to_ptr.hbm [resolvable:$true] %s69
      %s71 = sshll.u32 [#allocation8], 4
      %s72 = int_to_ptr.vmem [resolvable:$true] %s71
      %77 = dma.hbm_to_vmem [thread:$0]  %s70, 4096, %s72, [#allocation9], 256, 256, 16
    $region25: #{tpu_custom_call.1} parent=1 // pred_fallthru
      _
    // Predicated region
    $region26: #{tpu_custom_call.1} parent=1 // pred_check
      _
    $region27: #{tpu_custom_call.1} parent=1 // pred_check_branch
      %79 = sbr.rel (0) target = $region29
    $region28: #{tpu_custom_call.1} parent=1 // pred_region
      _
    $region29: #{tpu_custom_call.1} parent=1 // pred_fallthru
      _
    // Predicated region
    $region30: #{tpu_custom_call.1} parent=1 // pred_check
      _
    $region31: #{tpu_custom_call.1} parent=1 // pred_check_branch
      %81 = sbr.rel (0) target = $region33
    $region32: #{tpu_custom_call.1} parent=1 // pred_region
      %83 = vsyncadd [#allocation9], 0
      %s84 = sshll.u32 %s7, 4
      %s85 = int_to_ptr.hbm [resolvable:$true] %s84
      %s86 = sshll.u32 [#allocation10], 4
      %s87 = int_to_ptr.vmem [resolvable:$true] %s86
      %92 = dma.hbm_to_vmem [thread:$0]  %s85, 4096, %s87, [#allocation9], 128, 128, 8
    $region33: #{tpu_custom_call.1} parent=1 // pred_fallthru
      _
    // Predicated region
    $region34: #{tpu_custom_call.1} parent=1 // pred_check
      _
    $region35: #{tpu_custom_call.1} parent=1 // pred_check_branch
      %94 = sbr.rel (0) target = $region37
    $region36: #{tpu_custom_call.1} parent=1 // pred_region
      _
    $region37: #{tpu_custom_call.1} parent=1 // pred_fallthru
      _
    // Predicated region
    $region38: #{tpu_custom_call.1} parent=1 // pred_check
      _
    $region39: #{tpu_custom_call.1} parent=1 // pred_check_branch
      %96 = sbr.rel (0) target = $region41
    $region40: #{tpu_custom_call.1} parent=1 // pred_region
      _
    $region41: #{tpu_custom_call.1} parent=1 // pred_fallthru
      _
    // Predicated region
    $region42: #{tpu_custom_call.1} parent=1 // pred_check
      _
    $region43: #{tpu_custom_call.1} parent=1 // pred_check_branch
      %98 = sbr.rel (0) target = $region45
    $region44: #{tpu_custom_call.1} parent=1 // pred_region
      _
    $region45: #{tpu_custom_call.1} parent=1 // pred_fallthru
      _
    // Predicated region
    $region46: #{tpu_custom_call.1} parent=1 // pred_check
      _
    $region47: #{tpu_custom_call.1} parent=1 // pred_check_branch
      %100 = sbr.rel (0) target = $region49
    $region48: #{tpu_custom_call.1} parent=1 // pred_region
      _
    $region49: #{tpu_custom_call.1} parent=1 // pred_fallthru
      _
    // Predicated region
    $region50: #{tpu_custom_call.1} parent=1 // pred_check
      _
    $region51: #{tpu_custom_call.1} parent=1 // pred_check_branch
      %102 = sbr.rel (0) target = $region53
    $region52: #{tpu_custom_call.1} parent=1 // pred_region
      _
    $region53: #{tpu_custom_call.1} parent=1 // pred_fallthru
      _
    // Predicated region
    $region54: #{tpu_custom_call.1} parent=1 // pred_check
      _
    $region55: #{tpu_custom_call.1} parent=1 // pred_check_branch
      %104 = sbr.rel (0) target = $region57
    $region56: #{tpu_custom_call.1} parent=1 // pred_region
      %106 = dma.done [#allocation3], 512
    $region57: #{tpu_custom_call.1} parent=1 // pred_fallthru
      _
    // Predicated region
    $region58: #{tpu_custom_call.1} parent=1 // pred_check
      _
    $region59: #{tpu_custom_call.1} parent=1 // pred_check_branch
      %108 = sbr.rel (0) target = $region61
    $region60: #{tpu_custom_call.1} parent=1 // pred_region
      %110 = dma.done [#allocation6], 6144
    $region61: #{tpu_custom_call.1} parent=1 // pred_fallthru
      _
    // Predicated region
    $region62: #{tpu_custom_call.1} parent=1 // pred_check
      _
    $region63: #{tpu_custom_call.1} parent=1 // pred_check_branch
      %112 = sbr.rel (0) target = $region65
    $region64: #{tpu_custom_call.1} parent=1 // pred_region
      %114 = dma.done [#allocation6], 2048
    $region65: #{tpu_custom_call.1} parent=1 // pred_fallthru
      _
    // Predicated region
    $region66: #{tpu_custom_call.1} parent=1 // pred_check
      _
    $region67: #{tpu_custom_call.1} parent=1 // pred_check_branch
      %116 = sbr.rel (0) target = $region69
    $region68: #{tpu_custom_call.1} parent=1 // pred_region
      %118 = dma.done [#allocation9], 4096
    $region69: #{tpu_custom_call.1} parent=1 // pred_fallthru
      _
    // Predicated region
    $region70: #{tpu_custom_call.1} parent=1 // pred_check
      _
    $region71: #{tpu_custom_call.1} parent=1 // pred_check_branch
      %120 = sbr.rel (0) target = $region73
    $region72: #{tpu_custom_call.1} parent=1 // pred_region
      %122 = dma.done [#allocation9], 4096
    $region73: #{tpu_custom_call.1} parent=1 // pred_fallthru
      _
    %v123 = vld [vmem:[#allocation2] sm:$0xff]
    %v124 = vld [vmem:[#allocation2 + $0x8] sm:$0xff]
    %v125 = vld [vmem:[#allocation2 + $0x10] sm:$0xff]
    %v126 = vld [vmem:[#allocation2 + $0x18] sm:$0xff]
    %v127 = vld [vmem:[#allocation5] sm:$0xff]
    %v128 = vld [vmem:[#allocation5 + $0x8] sm:$0xff]
    %v129 = vld [vmem:[#allocation5 + $0x10] sm:$0xff]
    %v130 = vld [vmem:[#allocation5 + $0x18] sm:$0xff]
    %v131 = vld [vmem:[#allocation5 + $0x20] sm:$0xff]
    %v132 = vld [vmem:[#allocation5 + $0x28] sm:$0xff]
    %v133 = vld [vmem:[#allocation5 + $0x30] sm:$0xff]
    %v134 = vld [vmem:[#allocation5 + $0x38] sm:$0xff]
    %v135 = vld [vmem:[#allocation5 + $0x40] sm:$0xff]
    %v136 = vld [vmem:[#allocation5 + $0x48] sm:$0xff]
    %v137 = vld [vmem:[#allocation5 + $0x50] sm:$0xff]
    %v138 = vld [vmem:[#allocation5 + $0x58] sm:$0xff]
    %v139 = vld [vmem:[#allocation5 + $0x60] sm:$0xff]
    %v140 = vld [vmem:[#allocation5 + $0x68] sm:$0xff]
    %v141 = vld [vmem:[#allocation5 + $0x70] sm:$0xff]
    %v142 = vld [vmem:[#allocation5 + $0x78] sm:$0xff]
    %v143 = vld [vmem:[#allocation5 + $0x80] sm:$0xff]
    %v144 = vld [vmem:[#allocation5 + $0x88] sm:$0xff]
    %v145 = vld [vmem:[#allocation5 + $0x90] sm:$0xff]
    %v146 = vld [vmem:[#allocation5 + $0x98] sm:$0xff]
    %v147 = vld [vmem:[#allocation5 + $0xa0] sm:$0xff]
    %v148 = vld [vmem:[#allocation5 + $0xa8] sm:$0xff]
    %v149 = vld [vmem:[#allocation5 + $0xb0] sm:$0xff]
    %v150 = vld [vmem:[#allocation5 + $0xb8] sm:$0xff]
    %v151 = vld [vmem:[#allocation5 + $0xc0] sm:$0xff]
    %v152 = vld [vmem:[#allocation5 + $0xc8] sm:$0xff]
    %v153 = vld [vmem:[#allocation5 + $0xd0] sm:$0xff]
    %v154 = vld [vmem:[#allocation5 + $0xd8] sm:$0xff]
    %v155 = vld [vmem:[#allocation5 + $0xe0] sm:$0xff]
    %v156 = vld [vmem:[#allocation5 + $0xe8] sm:$0xff]
    %v157 = vld [vmem:[#allocation5 + $0xf0] sm:$0xff]
    %v158 = vld [vmem:[#allocation5 + $0xf8] sm:$0xff]
    %v159 = vld [vmem:[#allocation5 + $0x100] sm:$0xff]
    %v160 = vld [vmem:[#allocation5 + $0x108] sm:$0xff]
    %v161 = vld [vmem:[#allocation5 + $0x110] sm:$0xff]
    %v162 = vld [vmem:[#allocation5 + $0x118] sm:$0xff]
    %v163 = vld [vmem:[#allocation5 + $0x120] sm:$0xff]
    %v164 = vld [vmem:[#allocation5 + $0x128] sm:$0xff]
    %v165 = vld [vmem:[#allocation5 + $0x130] sm:$0xff]
    %v166 = vld [vmem:[#allocation5 + $0x138] sm:$0xff]
    %v167 = vld [vmem:[#allocation5 + $0x140] sm:$0xff]
    %v168 = vld [vmem:[#allocation5 + $0x148] sm:$0xff]
    %v169 = vld [vmem:[#allocation5 + $0x150] sm:$0xff]
    %v170 = vld [vmem:[#allocation5 + $0x158] sm:$0xff]
    %v171 = vld [vmem:[#allocation5 + $0x160] sm:$0xff]
    %v172 = vld [vmem:[#allocation5 + $0x168] sm:$0xff]
    %v173 = vld [vmem:[#allocation5 + $0x170] sm:$0xff]
    %v174 = vld [vmem:[#allocation5 + $0x178] sm:$0xff]
    %v175 = vld [vmem:[%s2] sm:$0x7]
    %v177 = vperm.slane %v175, 0
    %v178 = vperm.slane %v175, 1
    %v179 = vperm.slane %v175, 2
    %183 = vmatpush.msra.mxu0 %v172
    %184 = vmatpush.msra.mxu0 %v169
    %185 = vmatpush.msra.mxu0 %v166
    %186 = vmatpush.msra.mxu0 %v163
    %187 = vmatpush.msra.mxu0 %v160
    %188 = vmatpush.msra.mxu0 %v157
    %189 = vmatpush.msra.mxu0 %v154
    %190 = vmatpush.msra.mxu0 %v151
    %191 = vmatpush.msra.mxu0 %v148
    %192 = vmatpush.msra.mxu0 %v145
    %193 = vmatpush.msra.mxu0 %v142
    %194 = vmatpush.msra.mxu0 %v139
    %195 = vmatpush.msra.mxu0 %v136
    %196 = vmatpush.msra.mxu0 %v133
    %197 = vmatpush.msra.mxu0 %v130
    %198 = vmatpush.msra.mxu0 %v127
    %199 = vmatmul.f32.gmra.mxu0 %v123
    %v200 = vpop.f32.mrf.mxu0
    %v201 = vadd.f32 %v177, %v200
    %202 = vmatmul.f32.gmra.mxu0 %v125
    %v203 = vpop.f32.mrf.mxu0
    %v204 = vadd.f32 %v177, %v203
    %205 = vmatmul.f32.gmra.mxu0 %v124
    %v206 = vpop.f32.mrf.mxu0
    %v207 = vadd.f32 %v177, %v206
    %208 = vmatmul.f32.gmra.mxu0 %v126
    %v209 = vpop.f32.mrf.mxu0
    %v210 = vadd.f32 %v177, %v209
    %211 = vdwg.mxu0
    %212 = vmatpush.msra.mxu0 %v173
    %213 = vmatpush.msra.mxu0 %v170
    %214 = vmatpush.msra.mxu0 %v167
    %215 = vmatpush.msra.mxu0 %v164
    %216 = vmatpush.msra.mxu0 %v161
    %217 = vmatpush.msra.mxu0 %v158
    %218 = vmatpush.msra.mxu0 %v155
    %219 = vmatpush.msra.mxu0 %v152
    %220 = vmatpush.msra.mxu0 %v149
    %221 = vmatpush.msra.mxu0 %v146
    %222 = vmatpush.msra.mxu0 %v143
    %223 = vmatpush.msra.mxu0 %v140
    %224 = vmatpush.msra.mxu0 %v137
    %225 = vmatpush.msra.mxu0 %v134
    %226 = vmatpush.msra.mxu0 %v131
    %227 = vmatpush.msra.mxu0 %v128
    %228 = vmatmul.f32.gmra.mxu0 %v123
    %v229 = vpop.f32.mrf.mxu0
    %v230 = vadd.f32 %v178, %v229
    %231 = vmatmul.f32.gmra.mxu0 %v125
    %v232 = vpop.f32.mrf.mxu0
    %v233 = vadd.f32 %v178, %v232
    %234 = vmatmul.f32.gmra.mxu0 %v124
    %v235 = vpop.f32.mrf.mxu0
    %v236 = vadd.f32 %v178, %v235
    %237 = vmatmul.f32.gmra.mxu0 %v126
    %v238 = vpop.f32.mrf.mxu0
    %v239 = vadd.f32 %v178, %v238
    %240 = vdwg.mxu0
    %241 = vmatpush.msra.mxu0 %v174
    %242 = vmatpush.msra.mxu0 %v171
    %243 = vmatpush.msra.mxu0 %v168
    %244 = vmatpush.msra.mxu0 %v165
    %245 = vmatpush.msra.mxu0 %v162
    %246 = vmatpush.msra.mxu0 %v159
    %247 = vmatpush.msra.mxu0 %v156
    %248 = vmatpush.msra.mxu0 %v153
    %249 = vmatpush.msra.mxu0 %v150
    %250 = vmatpush.msra.mxu0 %v147
    %251 = vmatpush.msra.mxu0 %v144
    %252 = vmatpush.msra.mxu0 %v141
    %253 = vmatpush.msra.mxu0 %v138
    %254 = vmatpush.msra.mxu0 %v135
    %255 = vmatpush.msra.mxu0 %v132
    %256 = vmatpush.msra.mxu0 %v129
    %257 = vmatmul.f32.gmra.mxu0 %v123
    %v258 = vpop.f32.mrf.mxu0
    %v259 = vadd.f32 %v179, %v258
    %260 = vmatmul.f32.gmra.mxu0 %v125
    %v261 = vpop.f32.mrf.mxu0
    %v262 = vadd.f32 %v179, %v261
    %263 = vmatmul.f32.gmra.mxu0 %v124
    %v264 = vpop.f32.mrf.mxu0
    %v265 = vadd.f32 %v179, %v264
    %266 = vmatmul.f32.gmra.mxu0 %v126
    %v267 = vpop.f32.mrf.mxu0
    %v268 = vadd.f32 %v179, %v267
    %269 = vdwg.mxu0
    %v270 = vmul.f32 %v201, 0.17677669
    %v271 = vmul.f32 %v204, 0.17677669
    %v272 = vmul.f32 %v207, 0.17677669
    %v273 = vmul.f32 %v210, 0.17677669
    %276 = vrot.lane.b32.xlu0 %v270, 96
    %v277 = vpop.permute.xlu0 %276
    %278 = vrot.lane.b32.xlu0 %v271, 96
    %v279 = vpop.permute.xlu0 %278
    %280 = vrot.lane.b32.xlu0 %v270, 64
    %v281 = vpop.permute.xlu0 %280
    %282 = vrot.lane.b32.xlu0 %v271, 64
    %v283 = vpop.permute.xlu0 %282
    %284 = vrot.lane.b32.xlu0 %v270, 32
    %v285 = vpop.permute.xlu0 %284
    %286 = vrot.lane.b32.xlu0 %v271, 32
    %v287 = vpop.permute.xlu0 %286
    %290 = vrot.lane.b32.xlu0 %v272, 96
    %v291 = vpop.permute.xlu0 %290
    %292 = vrot.lane.b32.xlu0 %v273, 96
    %v293 = vpop.permute.xlu0 %292
    %294 = vrot.lane.b32.xlu0 %v272, 64
    %v295 = vpop.permute.xlu0 %294
    %296 = vrot.lane.b32.xlu0 %v273, 64
    %v297 = vpop.permute.xlu0 %296
    %298 = vrot.lane.b32.xlu0 %v272, 32
    %v299 = vpop.permute.xlu0 %298
    %300 = vrot.lane.b32.xlu0 %v273, 32
    %v301 = vpop.permute.xlu0 %300
    %304 = vrot.lane.b32.xlu0 %v230, 96
    %v305 = vpop.permute.xlu0 %304
    %306 = vrot.lane.b32.xlu0 %v233, 96
    %v307 = vpop.permute.xlu0 %306
    %308 = vrot.lane.b32.xlu0 %v230, 64
    %v309 = vpop.permute.xlu0 %308
    %310 = vrot.lane.b32.xlu0 %v233, 64
    %v311 = vpop.permute.xlu0 %310
    %312 = vrot.lane.b32.xlu0 %v230, 32
    %v313 = vpop.permute.xlu0 %312
    %314 = vrot.lane.b32.xlu0 %v233, 32
    %v315 = vpop.permute.xlu0 %314
    %318 = vrot.lane.b32.xlu0 %v236, 96
    %v319 = vpop.permute.xlu0 %318
    %320 = vrot.lane.b32.xlu0 %v239, 96
    %v321 = vpop.permute.xlu0 %320
    %322 = vrot.lane.b32.xlu0 %v236, 64
    %v323 = vpop.permute.xlu0 %322
    %324 = vrot.lane.b32.xlu0 %v239, 64
    %v325 = vpop.permute.xlu0 %324
    %326 = vrot.lane.b32.xlu0 %v236, 32
    %v327 = vpop.permute.xlu0 %326
    %328 = vrot.lane.b32.xlu0 %v239, 32
    %v329 = vpop.permute.xlu0 %328
    %332 = vrot.lane.b32.xlu0 %v259, 96
    %v333 = vpop.permute.xlu0 %332
    %334 = vrot.lane.b32.xlu0 %v262, 96
    %v335 = vpop.permute.xlu0 %334
    %338 = vrot.lane.b32.xlu0 %v259, 64
    %v339 = vpop.permute.xlu0 %338
    %340 = vrot.lane.b32.xlu0 %v262, 64
    %v341 = vpop.permute.xlu0 %340
    %344 = vrot.lane.b32.xlu0 %v259, 32
    %v345 = vpop.permute.xlu0 %344
    %346 = vrot.lane.b32.xlu0 %v262, 32
    %v347 = vpop.permute.xlu0 %346
    %352 = vrot.lane.b32.xlu0 %v265, 96
    %v353 = vpop.permute.xlu0 %352
    %354 = vrot.lane.b32.xlu0 %v268, 96
    %v355 = vpop.permute.xlu0 %354
    %358 = vrot.lane.b32.xlu0 %v265, 64
    %v359 = vpop.permute.xlu0 %358
    %360 = vrot.lane.b32.xlu0 %v268, 64
    %v361 = vpop.permute.xlu0 %360
    %364 = vrot.lane.b32.xlu0 %v265, 32
    %v365 = vpop.permute.xlu0 %364
    %366 = vrot.lane.b32.xlu0 %v268, 32
    %v367 = vpop.permute.xlu0 %366
    %vm370 = vcmask 261120
    %v371 = vsel %vm370, %v270, 0
    %v373 = vsel %vm370, %v271, 0
    %v375 = vsel %vm370, %v230, 0
    %v377 = vsel %vm370, %v233, 0
    %379 = vmatpush.xpose.msra.mxu0 0.0
    %380 = vmatpush.xpose.msra.mxu0 0.0
    %381 = vmatpush.xpose.msra.mxu0 0.0
    %382 = vmatpush.xpose.msra.mxu0 0.0
    %383 = vmatpush.xpose.msra.mxu0 0.0
    %384 = vmatpush.xpose.msra.mxu0 0.0
    %385 = vmatpush.xpose.msra.mxu0 0.0
    %386 = vmatpush.xpose.msra.mxu0 0.0
    %387 = vmatpush.xpose.msra.mxu0 0.0
    %388 = vmatpush.xpose.msra.mxu0 0.0
    %389 = vmatpush.xpose.msra.mxu0 0.0
    %390 = vmatpush.xpose.msra.mxu0 0.0
    %391 = vmatpush.xpose.msra.mxu0 0.0
    %392 = vmatpush.xpose.msra.mxu0 0.0
    %393 = vmatpush.xpose.msra.mxu0 %v377
    %394 = vmatpush.xpose.msra.mxu0 %v375
    %395 = vmatmul.f32.gmra.mxu0 %v371
    %v396 = vpop.f32.mrf.mxu0
    %v397 = vadd.f32 0.0, %v396
    %398 = vmatmul.f32.gmra.mxu0 %v373
    %v399 = vpop.f32.mrf.mxu0
    %v400 = vadd.f32 0.0, %v399
    %401 = vdwg.mxu0
    %v402 = vsel %vm370, %v277, 0
    %v404 = vsel %vm370, %v279, 0
    %v406 = vsel %vm370, %v305, 0
    %v408 = vsel %vm370, %v307, 0
    %410 = vmatpush.xpose.msra.mxu0 0.0
    %411 = vmatpush.xpose.msra.mxu0 0.0
    %412 = vmatpush.xpose.msra.mxu0 0.0
    %413 = vmatpush.xpose.msra.mxu0 0.0
    %414 = vmatpush.xpose.msra.mxu0 0.0
    %415 = vmatpush.xpose.msra.mxu0 0.0
    %416 = vmatpush.xpose.msra.mxu0 0.0
    %417 = vmatpush.xpose.msra.mxu0 0.0
    %418 = vmatpush.xpose.msra.mxu0 0.0
    %419 = vmatpush.xpose.msra.mxu0 0.0
    %420 = vmatpush.xpose.msra.mxu0 0.0
    %421 = vmatpush.xpose.msra.mxu0 0.0
    %422 = vmatpush.xpose.msra.mxu0 0.0
    %423 = vmatpush.xpose.msra.mxu0 0.0
    %424 = vmatpush.xpose.msra.mxu0 %v408
    %425 = vmatpush.xpose.msra.mxu0 %v406
    %426 = vmatmul.f32.gmra.mxu0 %v402
    %v427 = vpop.f32.mrf.mxu0
    %v428 = vadd.f32 0.0, %v427
    %429 = vmatmul.f32.gmra.mxu0 %v404
    %v430 = vpop.f32.mrf.mxu0
    %v431 = vadd.f32 0.0, %v430
    %432 = vdwg.mxu0
    %v433 = vsel %vm370, %v281, 0
    %v435 = vsel %vm370, %v283, 0
    %v437 = vsel %vm370, %v309, 0
    %v439 = vsel %vm370, %v311, 0
    %441 = vmatpush.xpose.msra.mxu0 0.0
    %442 = vmatpush.xpose.msra.mxu0 0.0
    %443 = vmatpush.xpose.msra.mxu0 0.0
    %444 = vmatpush.xpose.msra.mxu0 0.0
    %445 = vmatpush.xpose.msra.mxu0 0.0
    %446 = vmatpush.xpose.msra.mxu0 0.0
    %447 = vmatpush.xpose.msra.mxu0 0.0
    %448 = vmatpush.xpose.msra.mxu0 0.0
    %449 = vmatpush.xpose.msra.mxu0 0.0
    %450 = vmatpush.xpose.msra.mxu0 0.0
    %451 = vmatpush.xpose.msra.mxu0 0.0
    %452 = vmatpush.xpose.msra.mxu0 0.0
    %453 = vmatpush.xpose.msra.mxu0 0.0
    %454 = vmatpush.xpose.msra.mxu0 0.0
    %455 = vmatpush.xpose.msra.mxu0 %v439
    %456 = vmatpush.xpose.msra.mxu0 %v437
    %457 = vmatmul.f32.gmra.mxu0 %v433
    %v458 = vpop.f32.mrf.mxu0
    %v459 = vadd.f32 0.0, %v458
    %460 = vmatmul.f32.gmra.mxu0 %v435
    %v461 = vpop.f32.mrf.mxu0
    %v462 = vadd.f32 0.0, %v461
    %463 = vdwg.mxu0
    %v464 = vsel %vm370, %v285, 0
    %v466 = vsel %vm370, %v287, 0
    %v468 = vsel %vm370, %v313, 0
    %v470 = vsel %vm370, %v315, 0
    %472 = vmatpush.xpose.msra.mxu0 0.0
    %473 = vmatpush.xpose.msra.mxu0 0.0
    %474 = vmatpush.xpose.msra.mxu0 0.0
    %475 = vmatpush.xpose.msra.mxu0 0.0
    %476 = vmatpush.xpose.msra.mxu0 0.0
    %477 = vmatpush.xpose.msra.mxu0 0.0
    %478 = vmatpush.xpose.msra.mxu0 0.0
    %479 = vmatpush.xpose.msra.mxu0 0.0
    %480 = vmatpush.xpose.msra.mxu0 0.0
    %481 = vmatpush.xpose.msra.mxu0 0.0
    %482 = vmatpush.xpose.msra.mxu0 0.0
    %483 = vmatpush.xpose.msra.mxu0 0.0
    %484 = vmatpush.xpose.msra.mxu0 0.0
    %485 = vmatpush.xpose.msra.mxu0 0.0
    %486 = vmatpush.xpose.msra.mxu0 %v470
    %487 = vmatpush.xpose.msra.mxu0 %v468
    %488 = vmatmul.f32.gmra.mxu0 %v464
    %v489 = vpop.f32.mrf.mxu0
    %v490 = vadd.f32 0.0, %v489
    %491 = vmatmul.f32.gmra.mxu0 %v466
    %v492 = vpop.f32.mrf.mxu0
    %v493 = vadd.f32 0.0, %v492
    %494 = vdwg.mxu0
    %v495 = vsel %vm370, %v272, 0
    %v497 = vsel %vm370, %v273, 0
    %v499 = vsel %vm370, %v236, 0
    %v501 = vsel %vm370, %v239, 0
    %503 = vmatpush.xpose.msra.mxu0 0.0
    %504 = vmatpush.xpose.msra.mxu0 0.0
    %505 = vmatpush.xpose.msra.mxu0 0.0
    %506 = vmatpush.xpose.msra.mxu0 0.0
    %507 = vmatpush.xpose.msra.mxu0 0.0
    %508 = vmatpush.xpose.msra.mxu0 0.0
    %509 = vmatpush.xpose.msra.mxu0 0.0
    %510 = vmatpush.xpose.msra.mxu0 0.0
    %511 = vmatpush.xpose.msra.mxu0 0.0
    %512 = vmatpush.xpose.msra.mxu0 0.0
    %513 = vmatpush.xpose.msra.mxu0 0.0
    %514 = vmatpush.xpose.msra.mxu0 0.0
    %515 = vmatpush.xpose.msra.mxu0 0.0
    %516 = vmatpush.xpose.msra.mxu0 0.0
    %517 = vmatpush.xpose.msra.mxu0 %v501
    %518 = vmatpush.xpose.msra.mxu0 %v499
    %519 = vmatmul.f32.gmra.mxu0 %v495
    %v520 = vpop.f32.mrf.mxu0
    %v521 = vadd.f32 0.0, %v520
    %522 = vmatmul.f32.gmra.mxu0 %v497
    %v523 = vpop.f32.mrf.mxu0
    %v524 = vadd.f32 0.0, %v523
    %525 = vdwg.mxu0
    %v526 = vsel %vm370, %v291, 0
    %v528 = vsel %vm370, %v293, 0
    %v530 = vsel %vm370, %v319, 0
    %v532 = vsel %vm370, %v321, 0
    %534 = vmatpush.xpose.msra.mxu0 0.0
    %535 = vmatpush.xpose.msra.mxu0 0.0
    %536 = vmatpush.xpose.msra.mxu0 0.0
    %537 = vmatpush.xpose.msra.mxu0 0.0
    %538 = vmatpush.xpose.msra.mxu0 0.0
    %539 = vmatpush.xpose.msra.mxu0 0.0
    %540 = vmatpush.xpose.msra.mxu0 0.0
    %541 = vmatpush.xpose.msra.mxu0 0.0
    %542 = vmatpush.xpose.msra.mxu0 0.0
    %543 = vmatpush.xpose.msra.mxu0 0.0
    %544 = vmatpush.xpose.msra.mxu0 0.0
    %545 = vmatpush.xpose.msra.mxu0 0.0
    %546 = vmatpush.xpose.msra.mxu0 0.0
    %547 = vmatpush.xpose.msra.mxu0 0.0
    %548 = vmatpush.xpose.msra.mxu0 %v532
    %549 = vmatpush.xpose.msra.mxu0 %v530
    %550 = vmatmul.f32.gmra.mxu0 %v526
    %v551 = vpop.f32.mrf.mxu0
    %v552 = vadd.f32 0.0, %v551
    %553 = vmatmul.f32.gmra.mxu0 %v528
    %v554 = vpop.f32.mrf.mxu0
    %v555 = vadd.f32 0.0, %v554
    %556 = vdwg.mxu0
    %v557 = vsel %vm370, %v295, 0
    %v559 = vsel %vm370, %v297, 0
    %v561 = vsel %vm370, %v323, 0
    %v563 = vsel %vm370, %v325, 0
    %565 = vmatpush.xpose.msra.mxu0 0.0
    %566 = vmatpush.xpose.msra.mxu0 0.0
    %567 = vmatpush.xpose.msra.mxu0 0.0
    %568 = vmatpush.xpose.msra.mxu0 0.0
    %569 = vmatpush.xpose.msra.mxu0 0.0
    %570 = vmatpush.xpose.msra.mxu0 0.0
    %571 = vmatpush.xpose.msra.mxu0 0.0
    %572 = vmatpush.xpose.msra.mxu0 0.0
    %573 = vmatpush.xpose.msra.mxu0 0.0
    %574 = vmatpush.xpose.msra.mxu0 0.0
    %575 = vmatpush.xpose.msra.mxu0 0.0
    %576 = vmatpush.xpose.msra.mxu0 0.0
    %577 = vmatpush.xpose.msra.mxu0 0.0
    %578 = vmatpush.xpose.msra.mxu0 0.0
    %579 = vmatpush.xpose.msra.mxu0 %v563
    %580 = vmatpush.xpose.msra.mxu0 %v561
    %581 = vmatmul.f32.gmra.mxu0 %v557
    %v582 = vpop.f32.mrf.mxu0
    %v583 = vadd.f32 0.0, %v582
    %584 = vmatmul.f32.gmra.mxu0 %v559
    %v585 = vpop.f32.mrf.mxu0
    %v586 = vadd.f32 0.0, %v585
    %587 = vdwg.mxu0
    %v588 = vsel %vm370, %v299, 0
    %v590 = vsel %vm370, %v301, 0
    %v592 = vsel %vm370, %v327, 0
    %v594 = vsel %vm370, %v329, 0
    %596 = vmatpush.xpose.msra.mxu0 0.0
    %597 = vmatpush.xpose.msra.mxu0 0.0
    %598 = vmatpush.xpose.msra.mxu0 0.0
    %599 = vmatpush.xpose.msra.mxu0 0.0
    %600 = vmatpush.xpose.msra.mxu0 0.0
    %601 = vmatpush.xpose.msra.mxu0 0.0
    %602 = vmatpush.xpose.msra.mxu0 0.0
    %603 = vmatpush.xpose.msra.mxu0 0.0
    %604 = vmatpush.xpose.msra.mxu0 0.0
    %605 = vmatpush.xpose.msra.mxu0 0.0
    %606 = vmatpush.xpose.msra.mxu0 0.0
    %607 = vmatpush.xpose.msra.mxu0 0.0
    %608 = vmatpush.xpose.msra.mxu0 0.0
    %609 = vmatpush.xpose.msra.mxu0 0.0
    %610 = vmatpush.xpose.msra.mxu0 %v594
    %611 = vmatpush.xpose.msra.mxu0 %v592
    %612 = vmatmul.f32.gmra.mxu0 %v588
    %v613 = vpop.f32.mrf.mxu0
    %v614 = vadd.f32 0.0, %v613
    %615 = vmatmul.f32.gmra.mxu0 %v590
    %v616 = vpop.f32.mrf.mxu0
    %v617 = vadd.f32 0.0, %v616
    %618 = vdwg.mxu0
    %vm619 = vcmask 130048
    %v620 = vsel %vm619, %v397, -inf
    %621 = vmax.xlane.f32.xlu0 %v620
    %v622 = vpop.xlane.xlu0 %621
    %v623 = vsel %vm619, %v400, -inf
    %624 = vmax.xlane.f32.xlu0 %v623
    %v625 = vpop.xlane.xlu0 %624
    %v626 = vsel %vm619, %v428, -inf
    %627 = vmax.xlane.f32.xlu0 %v626
    %v628 = vpop.xlane.xlu0 %627
    %v629 = vsel %vm619, %v431, -inf
    %630 = vmax.xlane.f32.xlu0 %v629
    %v631 = vpop.xlane.xlu0 %630
    %v632 = vsel %vm619, %v459, -inf
    %633 = vmax.xlane.f32.xlu0 %v632
    %v634 = vpop.xlane.xlu0 %633
    %v635 = vsel %vm619, %v462, -inf
    %636 = vmax.xlane.f32.xlu0 %v635
    %v637 = vpop.xlane.xlu0 %636
    %v638 = vsel %vm619, %v490, -inf
    %639 = vmax.xlane.f32.xlu0 %v638
    %v640 = vpop.xlane.xlu0 %639
    %v641 = vsel %vm619, %v493, -inf
    %642 = vmax.xlane.f32.xlu0 %v641
    %v643 = vpop.xlane.xlu0 %642
    %v644 = vsel %vm619, %v521, -inf
    %645 = vmax.xlane.f32.xlu0 %v644
    %v646 = vpop.xlane.xlu0 %645
    %v647 = vsel %vm619, %v524, -inf
    %648 = vmax.xlane.f32.xlu0 %v647
    %v649 = vpop.xlane.xlu0 %648
    %v650 = vsel %vm619, %v552, -inf
    %651 = vmax.xlane.f32.xlu0 %v650
    %v652 = vpop.xlane.xlu0 %651
    %v653 = vsel %vm619, %v555, -inf
    %654 = vmax.xlane.f32.xlu0 %v653
    %v655 = vpop.xlane.xlu0 %654
    %v656 = vsel %vm619, %v583, -inf
    %657 = vmax.xlane.f32.xlu0 %v656
    %v658 = vpop.xlane.xlu0 %657
    %v659 = vsel %vm619, %v586, -inf
    %660 = vmax.xlane.f32.xlu0 %v659
    %v661 = vpop.xlane.xlu0 %660
    %v662 = vsel %vm619, %v614, -inf
    %663 = vmax.xlane.f32.xlu0 %v662
    %v664 = vpop.xlane.xlu0 %663
    %v665 = vsel %vm619, %v617, -inf
    %666 = vmax.xlane.f32.xlu0 %v665
    %v667 = vpop.xlane.xlu0 %666
    %v668 = vsub.f32 %v397, %v622
    %v669 = vsub.f32 %v400, %v625
    %v670 = vsub.f32 %v428, %v628
    %v671 = vsub.f32 %v431, %v631
    %v672 = vsub.f32 %v459, %v634
    %v673 = vsub.f32 %v462, %v637
    %v674 = vsub.f32 %v490, %v640
    %v675 = vsub.f32 %v493, %v643
    %v676 = vsub.f32 %v521, %v646
    %v677 = vsub.f32 %v524, %v649
    %v678 = vsub.f32 %v552, %v652
    %v679 = vsub.f32 %v555, %v655
    %v680 = vsub.f32 %v583, %v658
    %v681 = vsub.f32 %v586, %v661
    %v682 = vsub.f32 %v614, %v664
    %v683 = vsub.f32 %v617, %v667
    %v684 = vmul.f32 %v668, 1.442695
    %v685 = vpow.pop %v684
    %v686 = vmul.f32 %v669, 1.442695
    %v687 = vpow.pop %v686
    %v688 = vmul.f32 %v670, 1.442695
    %v689 = vpow.pop %v688
    %v690 = vmul.f32 %v671, 1.442695
    %v691 = vpow.pop %v690
    %v692 = vmul.f32 %v672, 1.442695
    %v693 = vpow.pop %v692
    %v694 = vmul.f32 %v673, 1.442695
    %v695 = vpow.pop %v694
    %v696 = vmul.f32 %v674, 1.442695
    %v697 = vpow.pop %v696
    %v698 = vmul.f32 %v675, 1.442695
    %v699 = vpow.pop %v698
    %v700 = vmul.f32 %v676, 1.442695
    %v701 = vpow.pop %v700
    %v702 = vmul.f32 %v677, 1.442695
    %v703 = vpow.pop %v702
    %v704 = vmul.f32 %v678, 1.442695
    %v705 = vpow.pop %v704
    %v706 = vmul.f32 %v679, 1.442695
    %v707 = vpow.pop %v706
    %v708 = vmul.f32 %v680, 1.442695
    %v709 = vpow.pop %v708
    %v710 = vmul.f32 %v681, 1.442695
    %v711 = vpow.pop %v710
    %v712 = vmul.f32 %v682, 1.442695
    %v713 = vpow.pop %v712
    %v714 = vmul.f32 %v683, 1.442695
    %v715 = vpow.pop %v714
    %v716 = vsel %vm619, %v685, 0.0
    %717 = vadd.xlane.f32.xlu0 %v716
    %v718 = vpop.xlane.xlu0 %717
    %v719 = vsel %vm619, %v687, 0.0
    %720 = vadd.xlane.f32.xlu0 %v719
    %v721 = vpop.xlane.xlu0 %720
    %v722 = vsel %vm619, %v689, 0.0
    %723 = vadd.xlane.f32.xlu0 %v722
    %v724 = vpop.xlane.xlu0 %723
    %v725 = vsel %vm619, %v691, 0.0
    %726 = vadd.xlane.f32.xlu0 %v725
    %v727 = vpop.xlane.xlu0 %726
    %v728 = vsel %vm619, %v693, 0.0
    %729 = vadd.xlane.f32.xlu0 %v728
    %v730 = vpop.xlane.xlu0 %729
    %v731 = vsel %vm619, %v695, 0.0
    %732 = vadd.xlane.f32.xlu0 %v731
    %v733 = vpop.xlane.xlu0 %732
    %v734 = vsel %vm619, %v697, 0.0
    %735 = vadd.xlane.f32.xlu0 %v734
    %v736 = vpop.xlane.xlu0 %735
    %v737 = vsel %vm619, %v699, 0.0
    %738 = vadd.xlane.f32.xlu0 %v737
    %v739 = vpop.xlane.xlu0 %738
    %v740 = vsel %vm619, %v701, 0.0
    %741 = vadd.xlane.f32.xlu0 %v740
    %v742 = vpop.xlane.xlu0 %741
    %v743 = vsel %vm619, %v703, 0.0
    %744 = vadd.xlane.f32.xlu0 %v743
    %v745 = vpop.xlane.xlu0 %744
    %v746 = vsel %vm619, %v705, 0.0
    %747 = vadd.xlane.f32.xlu0 %v746
    %v748 = vpop.xlane.xlu0 %747
    %v749 = vsel %vm619, %v707, 0.0
    %750 = vadd.xlane.f32.xlu0 %v749
    %v751 = vpop.xlane.xlu0 %750
    %v752 = vsel %vm619, %v709, 0.0
    %753 = vadd.xlane.f32.xlu0 %v752
    %v754 = vpop.xlane.xlu0 %753
    %v755 = vsel %vm619, %v711, 0.0
    %756 = vadd.xlane.f32.xlu0 %v755
    %v757 = vpop.xlane.xlu0 %756
    %v758 = vsel %vm619, %v713, 0.0
    %759 = vadd.xlane.f32.xlu0 %v758
    %v760 = vpop.xlane.xlu0 %759
    %v761 = vsel %vm619, %v715, 0.0
    %762 = vadd.xlane.f32.xlu0 %v761
    %v763 = vpop.xlane.xlu0 %762
    %v764 = vrcp.pop %v718
    %v765 = vmul.f32 %v718, %v764
    %v766 = vsub.f32 1.0, %v765
    %v767 = vmul.f32 %v764, %v766
    %v768 = vadd.f32 %v764, %v767
    %vm769 = vweird.f32 %v718
    %vm770 = vweird.f32 %v764
    %vm771 = vmor %vm769, %vm770
    %v772 = vsel %vm771, %v764, %v768
    %v773 = vand.u32 2147483647, %v718
    %vm774 = vcmp.eq.f32.partialorder %v773, 8.507059e+37
    %v775 = vand.u32 %v718, 2147483648
    %v776 = vor.u32 1.1754944e-38, %v775
    %v777 = vsel %vm774, %v776, %v772
    %v778 = vmul.f32 %v685, %v777
    %v779 = vrcp.pop %v721
    %v780 = vmul.f32 %v721, %v779
    %v781 = vsub.f32 1.0, %v780
    %v782 = vmul.f32 %v779, %v781
    %v783 = vadd.f32 %v779, %v782
    %vm784 = vweird.f32 %v721
    %vm785 = vweird.f32 %v779
    %vm786 = vmor %vm784, %vm785
    %v787 = vsel %vm786, %v779, %v783
    %v788 = vand.u32 2147483647, %v721
    %vm789 = vcmp.eq.f32.partialorder %v788, 8.507059e+37
    %v790 = vand.u32 %v721, 2147483648
    %v791 = vor.u32 1.1754944e-38, %v790
    %v792 = vsel %vm789, %v791, %v787
    %v793 = vmul.f32 %v687, %v792
    %v794 = vrcp.pop %v724
    %v795 = vmul.f32 %v724, %v794
    %v796 = vsub.f32 1.0, %v795
    %v797 = vmul.f32 %v794, %v796
    %v798 = vadd.f32 %v794, %v797
    %vm799 = vweird.f32 %v724
    %vm800 = vweird.f32 %v794
    %vm801 = vmor %vm799, %vm800
    %v802 = vsel %vm801, %v794, %v798
    %v803 = vand.u32 2147483647, %v724
    %vm804 = vcmp.eq.f32.partialorder %v803, 8.507059e+37
    %v805 = vand.u32 %v724, 2147483648
    %v806 = vor.u32 1.1754944e-38, %v805
    %v807 = vsel %vm804, %v806, %v802
    %v808 = vmul.f32 %v689, %v807
    %v809 = vrcp.pop %v727
    %v810 = vmul.f32 %v727, %v809
    %v811 = vsub.f32 1.0, %v810
    %v812 = vmul.f32 %v809, %v811
    %v813 = vadd.f32 %v809, %v812
    %vm814 = vweird.f32 %v727
    %vm815 = vweird.f32 %v809
    %vm816 = vmor %vm814, %vm815
    %v817 = vsel %vm816, %v809, %v813
    %v818 = vand.u32 2147483647, %v727
    %vm819 = vcmp.eq.f32.partialorder %v818, 8.507059e+37
    %v820 = vand.u32 %v727, 2147483648
    %v821 = vor.u32 1.1754944e-38, %v820
    %v822 = vsel %vm819, %v821, %v817
    %v823 = vmul.f32 %v691, %v822
    %v824 = vrcp.pop %v730
    %v825 = vmul.f32 %v730, %v824
    %v826 = vsub.f32 1.0, %v825
    %v827 = vmul.f32 %v824, %v826
    %v828 = vadd.f32 %v824, %v827
    %vm829 = vweird.f32 %v730
    %vm830 = vweird.f32 %v824
    %vm831 = vmor %vm829, %vm830
    %v832 = vsel %vm831, %v824, %v828
    %v833 = vand.u32 2147483647, %v730
    %vm834 = vcmp.eq.f32.partialorder %v833, 8.507059e+37
    %v835 = vand.u32 %v730, 2147483648
    %v836 = vor.u32 1.1754944e-38, %v835
    %v837 = vsel %vm834, %v836, %v832
    %v838 = vmul.f32 %v693, %v837
    %v839 = vrcp.pop %v733
    %v840 = vmul.f32 %v733, %v839
    %v841 = vsub.f32 1.0, %v840
    %v842 = vmul.f32 %v839, %v841
    %v843 = vadd.f32 %v839, %v842
    %vm844 = vweird.f32 %v733
    %vm845 = vweird.f32 %v839
    %vm846 = vmor %vm844, %vm845
    %v847 = vsel %vm846, %v839, %v843
    %v848 = vand.u32 2147483647, %v733
    %vm849 = vcmp.eq.f32.partialorder %v848, 8.507059e+37
    %v850 = vand.u32 %v733, 2147483648
    %v851 = vor.u32 1.1754944e-38, %v850
    %v852 = vsel %vm849, %v851, %v847
    %v853 = vmul.f32 %v695, %v852
    %v854 = vrcp.pop %v736
    %v855 = vmul.f32 %v736, %v854
    %v856 = vsub.f32 1.0, %v855
    %v857 = vmul.f32 %v854, %v856
    %v858 = vadd.f32 %v854, %v857
    %vm859 = vweird.f32 %v736
    %vm860 = vweird.f32 %v854
    %vm861 = vmor %vm859, %vm860
    %v862 = vsel %vm861, %v854, %v858
    %v863 = vand.u32 2147483647, %v736
    %vm864 = vcmp.eq.f32.partialorder %v863, 8.507059e+37
    %v865 = vand.u32 %v736, 2147483648
    %v866 = vor.u32 1.1754944e-38, %v865
    %v867 = vsel %vm864, %v866, %v862
    %v868 = vmul.f32 %v697, %v867
    %v869 = vrcp.pop %v739
    %v870 = vmul.f32 %v739, %v869
    %v871 = vsub.f32 1.0, %v870
    %v872 = vmul.f32 %v869, %v871
    %v873 = vadd.f32 %v869, %v872
    %vm874 = vweird.f32 %v739
    %vm875 = vweird.f32 %v869
    %vm876 = vmor %vm874, %vm875
    %v877 = vsel %vm876, %v869, %v873
    %v878 = vand.u32 2147483647, %v739
    %vm879 = vcmp.eq.f32.partialorder %v878, 8.507059e+37
    %v880 = vand.u32 %v739, 2147483648
    %v881 = vor.u32 1.1754944e-38, %v880
    %v882 = vsel %vm879, %v881, %v877
    %v883 = vmul.f32 %v699, %v882
    %v884 = vrcp.pop %v742
    %v885 = vmul.f32 %v742, %v884
    %v886 = vsub.f32 1.0, %v885
    %v887 = vmul.f32 %v884, %v886
    %v888 = vadd.f32 %v884, %v887
    %vm889 = vweird.f32 %v742
    %vm890 = vweird.f32 %v884
    %vm891 = vmor %vm889, %vm890
    %v892 = vsel %vm891, %v884, %v888
    %v893 = vand.u32 2147483647, %v742
    %vm894 = vcmp.eq.f32.partialorder %v893, 8.507059e+37
    %v895 = vand.u32 %v742, 2147483648
    %v896 = vor.u32 1.1754944e-38, %v895
    %v897 = vsel %vm894, %v896, %v892
    %v898 = vmul.f32 %v701, %v897
    %v899 = vrcp.pop %v745
    %v900 = vmul.f32 %v745, %v899
    %v901 = vsub.f32 1.0, %v900
    %v902 = vmul.f32 %v899, %v901
    %v903 = vadd.f32 %v899, %v902
    %vm904 = vweird.f32 %v745
    %vm905 = vweird.f32 %v899
    %vm906 = vmor %vm904, %vm905
    %v907 = vsel %vm906, %v899, %v903
    %v908 = vand.u32 2147483647, %v745
    %vm909 = vcmp.eq.f32.partialorder %v908, 8.507059e+37
    %v910 = vand.u32 %v745, 2147483648
    %v911 = vor.u32 1.1754944e-38, %v910
    %v912 = vsel %vm909, %v911, %v907
    %v913 = vmul.f32 %v703, %v912
    %v914 = vrcp.pop %v748
    %v915 = vmul.f32 %v748, %v914
    %v916 = vsub.f32 1.0, %v915
    %v917 = vmul.f32 %v914, %v916
    %v918 = vadd.f32 %v914, %v917
    %vm919 = vweird.f32 %v748
    %vm920 = vweird.f32 %v914
    %vm921 = vmor %vm919, %vm920
    %v922 = vsel %vm921, %v914, %v918
    %v923 = vand.u32 2147483647, %v748
    %vm924 = vcmp.eq.f32.partialorder %v923, 8.507059e+37
    %v925 = vand.u32 %v748, 2147483648
    %v926 = vor.u32 1.1754944e-38, %v925
    %v927 = vsel %vm924, %v926, %v922
    %v928 = vmul.f32 %v705, %v927
    %v929 = vrcp.pop %v751
    %v930 = vmul.f32 %v751, %v929
    %v931 = vsub.f32 1.0, %v930
    %v932 = vmul.f32 %v929, %v931
    %v933 = vadd.f32 %v929, %v932
    %vm934 = vweird.f32 %v751
    %vm935 = vweird.f32 %v929
    %vm936 = vmor %vm934, %vm935
    %v937 = vsel %vm936, %v929, %v933
    %v938 = vand.u32 2147483647, %v751
    %vm939 = vcmp.eq.f32.partialorder %v938, 8.507059e+37
    %v940 = vand.u32 %v751, 2147483648
    %v941 = vor.u32 1.1754944e-38, %v940
    %v942 = vsel %vm939, %v941, %v937
    %v943 = vmul.f32 %v707, %v942
    %v944 = vrcp.pop %v754
    %v945 = vmul.f32 %v754, %v944
    %v946 = vsub.f32 1.0, %v945
    %v947 = vmul.f32 %v944, %v946
    %v948 = vadd.f32 %v944, %v947
    %vm949 = vweird.f32 %v754
    %vm950 = vweird.f32 %v944
    %vm951 = vmor %vm949, %vm950
    %v952 = vsel %vm951, %v944, %v948
    %v953 = vand.u32 2147483647, %v754
    %vm954 = vcmp.eq.f32.partialorder %v953, 8.507059e+37
    %v955 = vand.u32 %v754, 2147483648
    %v956 = vor.u32 1.1754944e-38, %v955
    %v957 = vsel %vm954, %v956, %v952
    %v958 = vmul.f32 %v709, %v957
    %v959 = vrcp.pop %v757
    %v960 = vmul.f32 %v757, %v959
    %v961 = vsub.f32 1.0, %v960
    %v962 = vmul.f32 %v959, %v961
    %v963 = vadd.f32 %v959, %v962
    %vm964 = vweird.f32 %v757
    %vm965 = vweird.f32 %v959
    %vm966 = vmor %vm964, %vm965
    %v967 = vsel %vm966, %v959, %v963
    %v968 = vand.u32 2147483647, %v757
    %vm969 = vcmp.eq.f32.partialorder %v968, 8.507059e+37
    %v970 = vand.u32 %v757, 2147483648
    %v971 = vor.u32 1.1754944e-38, %v970
    %v972 = vsel %vm969, %v971, %v967
    %v973 = vmul.f32 %v711, %v972
    %v974 = vrcp.pop %v760
    %v975 = vmul.f32 %v760, %v974
    %v976 = vsub.f32 1.0, %v975
    %v977 = vmul.f32 %v974, %v976
    %v978 = vadd.f32 %v974, %v977
    %vm979 = vweird.f32 %v760
    %vm980 = vweird.f32 %v974
    %vm981 = vmor %vm979, %vm980
    %v982 = vsel %vm981, %v974, %v978
    %v983 = vand.u32 2147483647, %v760
    %vm984 = vcmp.eq.f32.partialorder %v983, 8.507059e+37
    %v985 = vand.u32 %v760, 2147483648
    %v986 = vor.u32 1.1754944e-38, %v985
    %v987 = vsel %vm984, %v986, %v982
    %v988 = vmul.f32 %v713, %v987
    %v989 = vrcp.pop %v763
    %v990 = vmul.f32 %v763, %v989
    %v991 = vsub.f32 1.0, %v990
    %v992 = vmul.f32 %v989, %v991
    %v993 = vadd.f32 %v989, %v992
    %vm994 = vweird.f32 %v763
    %vm995 = vweird.f32 %v989
    %vm996 = vmor %vm994, %vm995
    %v997 = vsel %vm996, %v989, %v993
    %v998 = vand.u32 2147483647, %v763
    %vm999 = vcmp.eq.f32.partialorder %v998, 8.507059e+37
    %v1000 = vand.u32 %v763, 2147483648
    %v1001 = vor.u32 1.1754944e-38, %v1000
    %v1002 = vsel %vm999, %v1001, %v997
    %v1003 = vmul.f32 %v715, %v1002
    %v1005 = vsel %vm619, %v778, 0
    %v1008 = vsel %vm619, %v793, 0
    %1010 = vmatpush.msra.mxu0 0.0
    %1011 = vmatpush.msra.mxu0 0.0
    %1012 = vmatpush.msra.mxu0 0.0
    %1013 = vmatpush.msra.mxu0 0.0
    %1014 = vmatpush.msra.mxu0 0.0
    %1015 = vmatpush.msra.mxu0 0.0
    %1016 = vmatpush.msra.mxu0 0.0
    %1017 = vmatpush.msra.mxu0 0.0
    %1018 = vmatpush.msra.mxu0 0.0
    %1019 = vmatpush.msra.mxu0 0.0
    %1020 = vmatpush.msra.mxu0 0.0
    %1021 = vmatpush.msra.mxu0 0.0
    %1022 = vmatpush.msra.mxu0 0.0
    %1023 = vmatpush.msra.mxu0 0.0
    %1024 = vmatpush.msra.mxu0 %v262
    %1025 = vmatpush.msra.mxu0 %v259
    %1026 = vmatmul.f32.gmra.mxu0 %v1005
    %v1027 = vpop.f32.mrf.mxu0
    %v1028 = vadd.f32 0.0, %v1027
    %1029 = vmatmul.f32.gmra.mxu0 %v1008
    %v1030 = vpop.f32.mrf.mxu0
    %v1031 = vadd.f32 0.0, %v1030
    %1032 = vdwg.mxu0
    %v1034 = vsel %vm619, %v808, 0
    %v1037 = vsel %vm619, %v823, 0
    %1039 = vmatpush.msra.mxu0 0.0
    %1040 = vmatpush.msra.mxu0 0.0
    %1041 = vmatpush.msra.mxu0 0.0
    %1042 = vmatpush.msra.mxu0 0.0
    %1043 = vmatpush.msra.mxu0 0.0
    %1044 = vmatpush.msra.mxu0 0.0
    %1045 = vmatpush.msra.mxu0 0.0
    %1046 = vmatpush.msra.mxu0 0.0
    %1047 = vmatpush.msra.mxu0 0.0
    %1048 = vmatpush.msra.mxu0 0.0
    %1049 = vmatpush.msra.mxu0 0.0
    %1050 = vmatpush.msra.mxu0 0.0
    %1051 = vmatpush.msra.mxu0 0.0
    %1052 = vmatpush.msra.mxu0 0.0
    %1053 = vmatpush.msra.mxu0 %v335
    %1054 = vmatpush.msra.mxu0 %v333
    %1055 = vmatmul.f32.gmra.mxu0 %v1034
    %v1056 = vpop.f32.mrf.mxu0
    %v1057 = vadd.f32 0.0, %v1056
    %1058 = vmatmul.f32.gmra.mxu0 %v1037
    %v1059 = vpop.f32.mrf.mxu0
    %v1060 = vadd.f32 0.0, %v1059
    %1061 = vdwg.mxu0
    %v1063 = vsel %vm619, %v838, 0
    %v1066 = vsel %vm619, %v853, 0
    %1068 = vmatpush.msra.mxu0 0.0
    %1069 = vmatpush.msra.mxu0 0.0
    %1070 = vmatpush.msra.mxu0 0.0
    %1071 = vmatpush.msra.mxu0 0.0
    %1072 = vmatpush.msra.mxu0 0.0
    %1073 = vmatpush.msra.mxu0 0.0
    %1074 = vmatpush.msra.mxu0 0.0
    %1075 = vmatpush.msra.mxu0 0.0
    %1076 = vmatpush.msra.mxu0 0.0
    %1077 = vmatpush.msra.mxu0 0.0
    %1078 = vmatpush.msra.mxu0 0.0
    %1079 = vmatpush.msra.mxu0 0.0
    %1080 = vmatpush.msra.mxu0 0.0
    %1081 = vmatpush.msra.mxu0 0.0
    %1082 = vmatpush.msra.mxu0 %v341
    %1083 = vmatpush.msra.mxu0 %v339
    %1084 = vmatmul.f32.gmra.mxu0 %v1063
    %v1085 = vpop.f32.mrf.mxu0
    %v1086 = vadd.f32 0.0, %v1085
    %1087 = vmatmul.f32.gmra.mxu0 %v1066
    %v1088 = vpop.f32.mrf.mxu0
    %v1089 = vadd.f32 0.0, %v1088
    %1090 = vdwg.mxu0
    %v1092 = vsel %vm619, %v868, 0
    %v1095 = vsel %vm619, %v883, 0
    %1097 = vmatpush.msra.mxu0 0.0
    %1098 = vmatpush.msra.mxu0 0.0
    %1099 = vmatpush.msra.mxu0 0.0
    %1100 = vmatpush.msra.mxu0 0.0
    %1101 = vmatpush.msra.mxu0 0.0
    %1102 = vmatpush.msra.mxu0 0.0
    %1103 = vmatpush.msra.mxu0 0.0
    %1104 = vmatpush.msra.mxu0 0.0
    %1105 = vmatpush.msra.mxu0 0.0
    %1106 = vmatpush.msra.mxu0 0.0
    %1107 = vmatpush.msra.mxu0 0.0
    %1108 = vmatpush.msra.mxu0 0.0
    %1109 = vmatpush.msra.mxu0 0.0
    %1110 = vmatpush.msra.mxu0 0.0
    %1111 = vmatpush.msra.mxu0 %v347
    %1112 = vmatpush.msra.mxu0 %v345
    %1113 = vmatmul.f32.gmra.mxu0 %v1092
    %v1114 = vpop.f32.mrf.mxu0
    %v1115 = vadd.f32 0.0, %v1114
    %1116 = vmatmul.f32.gmra.mxu0 %v1095
    %v1117 = vpop.f32.mrf.mxu0
    %v1118 = vadd.f32 0.0, %v1117
    %1119 = vdwg.mxu0
    %v1121 = vsel %vm619, %v898, 0
    %v1124 = vsel %vm619, %v913, 0
    %1126 = vmatpush.msra.mxu0 0.0
    %1127 = vmatpush.msra.mxu0 0.0
    %1128 = vmatpush.msra.mxu0 0.0
    %1129 = vmatpush.msra.mxu0 0.0
    %1130 = vmatpush.msra.mxu0 0.0
    %1131 = vmatpush.msra.mxu0 0.0
    %1132 = vmatpush.msra.mxu0 0.0
    %1133 = vmatpush.msra.mxu0 0.0
    %1134 = vmatpush.msra.mxu0 0.0
    %1135 = vmatpush.msra.mxu0 0.0
    %1136 = vmatpush.msra.mxu0 0.0
    %1137 = vmatpush.msra.mxu0 0.0
    %1138 = vmatpush.msra.mxu0 0.0
    %1139 = vmatpush.msra.mxu0 0.0
    %1140 = vmatpush.msra.mxu0 %v268
    %1141 = vmatpush.msra.mxu0 %v265
    %1142 = vmatmul.f32.gmra.mxu0 %v1121
    %v1143 = vpop.f32.mrf.mxu0
    %v1144 = vadd.f32 0.0, %v1143
    %1145 = vmatmul.f32.gmra.mxu0 %v1124
    %v1146 = vpop.f32.mrf.mxu0
    %v1147 = vadd.f32 0.0, %v1146
    %1148 = vdwg.mxu0
    %v1150 = vsel %vm619, %v928, 0
    %v1153 = vsel %vm619, %v943, 0
    %1155 = vmatpush.msra.mxu0 0.0
    %1156 = vmatpush.msra.mxu0 0.0
    %1157 = vmatpush.msra.mxu0 0.0
    %1158 = vmatpush.msra.mxu0 0.0
    %1159 = vmatpush.msra.mxu0 0.0
    %1160 = vmatpush.msra.mxu0 0.0
    %1161 = vmatpush.msra.mxu0 0.0
    %1162 = vmatpush.msra.mxu0 0.0
    %1163 = vmatpush.msra.mxu0 0.0
    %1164 = vmatpush.msra.mxu0 0.0
    %1165 = vmatpush.msra.mxu0 0.0
    %1166 = vmatpush.msra.mxu0 0.0
    %1167 = vmatpush.msra.mxu0 0.0
    %1168 = vmatpush.msra.mxu0 0.0
    %1169 = vmatpush.msra.mxu0 %v355
    %1170 = vmatpush.msra.mxu0 %v353
    %1171 = vmatmul.f32.gmra.mxu0 %v1150
    %v1172 = vpop.f32.mrf.mxu0
    %v1173 = vadd.f32 0.0, %v1172
    %1174 = vmatmul.f32.gmra.mxu0 %v1153
    %v1175 = vpop.f32.mrf.mxu0
    %v1176 = vadd.f32 0.0, %v1175
    %1177 = vdwg.mxu0
    %v1179 = vsel %vm619, %v958, 0
    %v1182 = vsel %vm619, %v973, 0
    %1184 = vmatpush.msra.mxu0 0.0
    %1185 = vmatpush.msra.mxu0 0.0
    %1186 = vmatpush.msra.mxu0 0.0
    %1187 = vmatpush.msra.mxu0 0.0
    %1188 = vmatpush.msra.mxu0 0.0
    %1189 = vmatpush.msra.mxu0 0.0
    %1190 = vmatpush.msra.mxu0 0.0
    %1191 = vmatpush.msra.mxu0 0.0
    %1192 = vmatpush.msra.mxu0 0.0
    %1193 = vmatpush.msra.mxu0 0.0
    %1194 = vmatpush.msra.mxu0 0.0
    %1195 = vmatpush.msra.mxu0 0.0
    %1196 = vmatpush.msra.mxu0 0.0
    %1197 = vmatpush.msra.mxu0 0.0
    %1198 = vmatpush.msra.mxu0 %v361
    %1199 = vmatpush.msra.mxu0 %v359
    %1200 = vmatmul.f32.gmra.mxu0 %v1179
    %v1201 = vpop.f32.mrf.mxu0
    %v1202 = vadd.f32 0.0, %v1201
    %1203 = vmatmul.f32.gmra.mxu0 %v1182
    %v1204 = vpop.f32.mrf.mxu0
    %v1205 = vadd.f32 0.0, %v1204
    %1206 = vdwg.mxu0
    %v1208 = vsel %vm619, %v988, 0
    %v1211 = vsel %vm619, %v1003, 0
    %1213 = vmatpush.msra.mxu0 0.0
    %1214 = vmatpush.msra.mxu0 0.0
    %1215 = vmatpush.msra.mxu0 0.0
    %1216 = vmatpush.msra.mxu0 0.0
    %1217 = vmatpush.msra.mxu0 0.0
    %1218 = vmatpush.msra.mxu0 0.0
    %1219 = vmatpush.msra.mxu0 0.0
    %1220 = vmatpush.msra.mxu0 0.0
    %1221 = vmatpush.msra.mxu0 0.0
    %1222 = vmatpush.msra.mxu0 0.0
    %1223 = vmatpush.msra.mxu0 0.0
    %1224 = vmatpush.msra.mxu0 0.0
    %1225 = vmatpush.msra.mxu0 0.0
    %1226 = vmatpush.msra.mxu0 0.0
    %1227 = vmatpush.msra.mxu0 %v367
    %1228 = vmatpush.msra.mxu0 %v365
    %1229 = vmatmul.f32.gmra.mxu0 %v1208
    %v1230 = vpop.f32.mrf.mxu0
    %v1231 = vadd.f32 0.0, %v1230
    %1232 = vmatmul.f32.gmra.mxu0 %v1211
    %v1233 = vpop.f32.mrf.mxu0
    %v1234 = vadd.f32 0.0, %v1233
    %1235 = vdwg.mxu0
    %1238 = vrot.lane.b32.xlu0 %v1057, 32
    %v1239 = vpop.permute.xlu0 %1238
    %1240 = vrot.lane.b32.xlu0 %v1060, 32
    %v1241 = vpop.permute.xlu0 %1240
    %1246 = vrot.lane.b32.xlu0 %v1086, 64
    %v1247 = vpop.permute.xlu0 %1246
    %1248 = vrot.lane.b32.xlu0 %v1089, 64
    %v1249 = vpop.permute.xlu0 %1248
    %1254 = vrot.lane.b32.xlu0 %v1115, 96
    %v1255 = vpop.permute.xlu0 %1254
    %1256 = vrot.lane.b32.xlu0 %v1118, 96
    %v1257 = vpop.permute.xlu0 %1256
    %v1260 = vsel %vm370, %v1028, %v1239
    %v1261 = vsel %vm370, %v1031, %v1241
    %vm1262 = vcmask 523264
    %v1263 = vsel %vm1262, %v1260, %v1247
    %v1264 = vsel %vm1262, %v1261, %v1249
    %vm1265 = vcmask 785408
    %v1266 = vsel %vm1265, %v1263, %v1255
    %v1267 = vsel %vm1265, %v1264, %v1257
    %1270 = vrot.lane.b32.xlu0 %v1173, 32
    %v1271 = vpop.permute.xlu0 %1270
    %1272 = vrot.lane.b32.xlu0 %v1176, 32
    %v1273 = vpop.permute.xlu0 %1272
    %1278 = vrot.lane.b32.xlu0 %v1202, 64
    %v1279 = vpop.permute.xlu0 %1278
    %1280 = vrot.lane.b32.xlu0 %v1205, 64
    %v1281 = vpop.permute.xlu0 %1280
    %1286 = vrot.lane.b32.xlu0 %v1231, 96
    %v1287 = vpop.permute.xlu0 %1286
    %1288 = vrot.lane.b32.xlu0 %v1234, 96
    %v1289 = vpop.permute.xlu0 %1288
    %v1292 = vsel %vm370, %v1144, %v1271
    %v1293 = vsel %vm370, %v1147, %v1273
    %v1294 = vsel %vm1262, %v1292, %v1279
    %v1295 = vsel %vm1262, %v1293, %v1281
    %v1296 = vsel %vm1265, %v1294, %v1287
    %v1297 = vsel %vm1265, %v1295, %v1289
    %v1298 = vld [vmem:[#allocation7] sm:$0xff]
    %v1299 = vld [vmem:[#allocation7 + $0x8] sm:$0xff]
    %v1300 = vld [vmem:[#allocation7 + $0x10] sm:$0xff]
    %v1301 = vld [vmem:[#allocation7 + $0x18] sm:$0xff]
    %v1302 = vld [vmem:[#allocation7 + $0x20] sm:$0xff]
    %v1303 = vld [vmem:[#allocation7 + $0x28] sm:$0xff]
    %v1304 = vld [vmem:[#allocation7 + $0x30] sm:$0xff]
    %v1305 = vld [vmem:[#allocation7 + $0x38] sm:$0xff]
    %v1306 = vld [vmem:[#allocation7 + $0x40] sm:$0xff]
    %v1307 = vld [vmem:[#allocation7 + $0x48] sm:$0xff]
    %v1308 = vld [vmem:[#allocation7 + $0x50] sm:$0xff]
    %v1309 = vld [vmem:[#allocation7 + $0x58] sm:$0xff]
    %v1310 = vld [vmem:[#allocation7 + $0x60] sm:$0xff]
    %v1311 = vld [vmem:[#allocation7 + $0x68] sm:$0xff]
    %v1312 = vld [vmem:[#allocation7 + $0x70] sm:$0xff]
    %v1313 = vld [vmem:[#allocation7 + $0x78] sm:$0xff]
    %v1314 = vld [vmem:[%s4] sm:$0x1]
    %v1316 = vperm.slane %v1314, 0
    %1318 = vmatpush.msra.mxu0 %v1313
    %1319 = vmatpush.msra.mxu0 %v1312
    %1320 = vmatpush.msra.mxu0 %v1311
    %1321 = vmatpush.msra.mxu0 %v1310
    %1322 = vmatpush.msra.mxu0 %v1309
    %1323 = vmatpush.msra.mxu0 %v1308
    %1324 = vmatpush.msra.mxu0 %v1307
    %1325 = vmatpush.msra.mxu0 %v1306
    %1326 = vmatpush.msra.mxu0 %v1305
    %1327 = vmatpush.msra.mxu0 %v1304
    %1328 = vmatpush.msra.mxu0 %v1303
    %1329 = vmatpush.msra.mxu0 %v1302
    %1330 = vmatpush.msra.mxu0 %v1301
    %1331 = vmatpush.msra.mxu0 %v1300
    %1332 = vmatpush.msra.mxu0 %v1299
    %1333 = vmatpush.msra.mxu0 %v1298
    %1334 = vmatmul.f32.gmra.mxu0 %v1266
    %v1335 = vpop.f32.mrf.mxu0
    %v1336 = vadd.f32 %v1316, %v1335
    %1337 = vmatmul.f32.gmra.mxu0 %v1267
    %v1338 = vpop.f32.mrf.mxu0
    %v1339 = vadd.f32 %v1316, %v1338
    %1340 = vmatmul.f32.gmra.mxu0 %v1296
    %v1341 = vpop.f32.mrf.mxu0
    %v1342 = vadd.f32 %v1316, %v1341
    %1343 = vmatmul.f32.gmra.mxu0 %v1297
    %v1344 = vpop.f32.mrf.mxu0
    %v1345 = vadd.f32 %v1316, %v1344
    %1346 = vdwg.mxu0
    %v1347 = vadd.f32 %v123, %v1336
    %v1348 = vadd.f32 %v125, %v1339
    %v1349 = vadd.f32 %v124, %v1342
    %v1350 = vadd.f32 %v126, %v1345
    %v1351 = vld [vmem:[%s9] sm:$0x1]
    %v1352 = vld [vmem:[%s10] sm:$0x1]
    %1353 = vadd.xlane.f32.xlu0 %v1347
    %v1354 = vpop.xlane.xlu0 %1353
    %1355 = vadd.xlane.f32.xlu0 %v1348
    %v1356 = vpop.xlane.xlu0 %1355
    %1357 = vadd.xlane.f32.xlu0 %v1349
    %v1358 = vpop.xlane.xlu0 %1357
    %1359 = vadd.xlane.f32.xlu0 %v1350
    %v1360 = vpop.xlane.xlu0 %1359
    %v1361 = vrcp.pop 128.0
    %v1362 = vmul.f32 128.0, %v1361
    %v1363 = vsub.f32 1.0, %v1362
    %v1364 = vmul.f32 %v1361, %v1363
    %v1365 = vadd.f32 %v1361, %v1364
    %vm1366 = vweird.f32 %v1361
    %v1367 = vsel %vm1366, %v1361, %v1365
    %v1368 = vmul.f32 %v1354, %v1367
    %v1369 = vmul.f32 %v1356, %v1367
    %v1370 = vmul.f32 %v1358, %v1367
    %v1371 = vmul.f32 %v1360, %v1367
    %v1372 = vsub.f32 %v1347, %v1368
    %v1373 = vsub.f32 %v1348, %v1369
    %v1374 = vsub.f32 %v1349, %v1370
    %v1375 = vsub.f32 %v1350, %v1371
    %v1376 = vmul.f32 %v1372, %v1372
    %v1377 = vmul.f32 %v1373, %v1373
    %v1378 = vmul.f32 %v1374, %v1374
    %v1379 = vmul.f32 %v1375, %v1375
    %1380 = vadd.xlane.f32.xlu0 %v1376
    %v1381 = vpop.xlane.xlu0 %1380
    %1382 = vadd.xlane.f32.xlu0 %v1377
    %v1383 = vpop.xlane.xlu0 %1382
    %1384 = vadd.xlane.f32.xlu0 %v1378
    %v1385 = vpop.xlane.xlu0 %1384
    %1386 = vadd.xlane.f32.xlu0 %v1379
    %v1387 = vpop.xlane.xlu0 %1386
    %v1388 = vmul.f32 %v1381, %v1367
    %v1389 = vmul.f32 %v1383, %v1367
    %v1390 = vmul.f32 %v1385, %v1367
    %v1391 = vmul.f32 %v1387, %v1367
    %v1392 = vadd.f32 %v1388, 1e-05
    %v1393 = vadd.f32 %v1389, 1e-05
    %v1394 = vadd.f32 %v1390, 1e-05
    %v1395 = vadd.f32 %v1391, 1e-05
    %v1396 = vrsqrt.pop %v1392
    %v1397 = vmul.f32 %v1396, %v1392
    %v1398 = vmul.f32 %v1397, %v1396
    %v1399 = vmul.f32 0.5, %v1398
    %v1400 = vsub.f32 1.5, %v1399
    %v1401 = vmul.f32 %v1396, %v1400
    %vm1402 = vweird.f32 %v1392
    %vm1403 = vweird.f32 %v1396
    %vm1404 = vmor %vm1402, %vm1403
    %v1405 = vsel %vm1404, %v1396, %v1401
    %v1406 = vrsqrt.pop %v1393
    %v1407 = vmul.f32 %v1406, %v1393
    %v1408 = vmul.f32 %v1407, %v1406
    %v1409 = vmul.f32 0.5, %v1408
    %v1410 = vsub.f32 1.5, %v1409
    %v1411 = vmul.f32 %v1406, %v1410
    %vm1412 = vweird.f32 %v1393
    %vm1413 = vweird.f32 %v1406
    %vm1414 = vmor %vm1412, %vm1413
    %v1415 = vsel %vm1414, %v1406, %v1411
    %v1416 = vrsqrt.pop %v1394
    %v1417 = vmul.f32 %v1416, %v1394
    %v1418 = vmul.f32 %v1417, %v1416
    %v1419 = vmul.f32 0.5, %v1418
    %v1420 = vsub.f32 1.5, %v1419
    %v1421 = vmul.f32 %v1416, %v1420
    %vm1422 = vweird.f32 %v1394
    %vm1423 = vweird.f32 %v1416
    %vm1424 = vmor %vm1422, %vm1423
    %v1425 = vsel %vm1424, %v1416, %v1421
    %v1426 = vrsqrt.pop %v1395
    %v1427 = vmul.f32 %v1426, %v1395
    %v1428 = vmul.f32 %v1427, %v1426
    %v1429 = vmul.f32 0.5, %v1428
    %v1430 = vsub.f32 1.5, %v1429
    %v1431 = vmul.f32 %v1426, %v1430
    %vm1432 = vweird.f32 %v1395
    %vm1433 = vweird.f32 %v1426
    %vm1434 = vmor %vm1432, %vm1433
    %v1435 = vsel %vm1434, %v1426, %v1431
    %v1436 = vmul.f32 %v1372, %v1405
    %v1437 = vmul.f32 %v1373, %v1415
    %v1438 = vmul.f32 %v1374, %v1425
    %v1439 = vmul.f32 %v1375, %v1435
    %v1441 = vperm.slane %v1351, 0
    %v1443 = vmul.f32 %v1436, %v1441
    %v1444 = vmul.f32 %v1437, %v1441
    %v1445 = vmul.f32 %v1438, %v1441
    %v1446 = vmul.f32 %v1439, %v1441
    %v1448 = vperm.slane %v1352, 0
    %v1450 = vadd.f32 %v1443, %v1448
    %v1451 = vadd.f32 %v1444, %v1448
    %v1452 = vadd.f32 %v1445, %v1448
    %v1453 = vadd.f32 %v1446, %v1448
    %v1454 = vld [vmem:[#allocation8] sm:$0xff]
    %v1455 = vld [vmem:[#allocation8 + $0x8] sm:$0xff]
    %v1456 = vld [vmem:[#allocation8 + $0x10] sm:$0xff]
    %v1457 = vld [vmem:[#allocation8 + $0x18] sm:$0xff]
    %v1458 = vld [vmem:[#allocation8 + $0x20] sm:$0xff]
    %v1459 = vld [vmem:[#allocation8 + $0x28] sm:$0xff]
    %v1460 = vld [vmem:[#allocation8 + $0x30] sm:$0xff]
    %v1461 = vld [vmem:[#allocation8 + $0x38] sm:$0xff]
    %v1462 = vld [vmem:[#allocation8 + $0x40] sm:$0xff]
    %v1463 = vld [vmem:[#allocation8 + $0x48] sm:$0xff]
    %v1464 = vld [vmem:[#allocation8 + $0x50] sm:$0xff]
    %v1465 = vld [vmem:[#allocation8 + $0x58] sm:$0xff]
    %v1466 = vld [vmem:[#allocation8 + $0x60] sm:$0xff]
    %v1467 = vld [vmem:[#allocation8 + $0x68] sm:$0xff]
    %v1468 = vld [vmem:[#allocation8 + $0x70] sm:$0xff]
    %v1469 = vld [vmem:[#allocation8 + $0x78] sm:$0xff]
    %v1470 = vld [vmem:[#allocation8 + $0x80] sm:$0xff]
    %v1471 = vld [vmem:[#allocation8 + $0x88] sm:$0xff]
    %v1472 = vld [vmem:[#allocation8 + $0x90] sm:$0xff]
    %v1473 = vld [vmem:[#allocation8 + $0x98] sm:$0xff]
    %v1474 = vld [vmem:[#allocation8 + $0xa0] sm:$0xff]
    %v1475 = vld [vmem:[#allocation8 + $0xa8] sm:$0xff]
    %v1476 = vld [vmem:[#allocation8 + $0xb0] sm:$0xff]
    %v1477 = vld [vmem:[#allocation8 + $0xb8] sm:$0xff]
    %v1478 = vld [vmem:[#allocation8 + $0xc0] sm:$0xff]
    %v1479 = vld [vmem:[#allocation8 + $0xc8] sm:$0xff]
    %v1480 = vld [vmem:[#allocation8 + $0xd0] sm:$0xff]
    %v1481 = vld [vmem:[#allocation8 + $0xd8] sm:$0xff]
    %v1482 = vld [vmem:[#allocation8 + $0xe0] sm:$0xff]
    %v1483 = vld [vmem:[#allocation8 + $0xe8] sm:$0xff]
    %v1484 = vld [vmem:[#allocation8 + $0xf0] sm:$0xff]
    %v1485 = vld [vmem:[#allocation8 + $0xf8] sm:$0xff]
    %v1486 = vld [vmem:[%s6] sm:$0x3]
    %v1488 = vperm.slane %v1486, 0
    %v1489 = vperm.slane %v1486, 1
    %1492 = vmatpush.msra.mxu0 %v1484
    %1493 = vmatpush.msra.mxu0 %v1482
    %1494 = vmatpush.msra.mxu0 %v1480
    %1495 = vmatpush.msra.mxu0 %v1478
    %1496 = vmatpush.msra.mxu0 %v1476
    %1497 = vmatpush.msra.mxu0 %v1474
    %1498 = vmatpush.msra.mxu0 %v1472
    %1499 = vmatpush.msra.mxu0 %v1470
    %1500 = vmatpush.msra.mxu0 %v1468
    %1501 = vmatpush.msra.mxu0 %v1466
    %1502 = vmatpush.msra.mxu0 %v1464
    %1503 = vmatpush.msra.mxu0 %v1462
    %1504 = vmatpush.msra.mxu0 %v1460
    %1505 = vmatpush.msra.mxu0 %v1458
    %1506 = vmatpush.msra.mxu0 %v1456
    %1507 = vmatpush.msra.mxu0 %v1454
    %1508 = vmatmul.f32.gmra.mxu0 %v1450
    %v1509 = vpop.f32.mrf.mxu0
    %v1510 = vadd.f32 %v1488, %v1509
    %1511 = vmatmul.f32.gmra.mxu0 %v1451
    %v1512 = vpop.f32.mrf.mxu0
    %v1513 = vadd.f32 %v1488, %v1512
    %1514 = vmatmul.f32.gmra.mxu0 %v1452
    %v1515 = vpop.f32.mrf.mxu0
    %v1516 = vadd.f32 %v1488, %v1515
    %1517 = vmatmul.f32.gmra.mxu0 %v1453
    %v1518 = vpop.f32.mrf.mxu0
    %v1519 = vadd.f32 %v1488, %v1518
    %1520 = vdwg.mxu0
    %1521 = vmatpush.msra.mxu0 %v1485
    %1522 = vmatpush.msra.mxu0 %v1483
    %1523 = vmatpush.msra.mxu0 %v1481
    %1524 = vmatpush.msra.mxu0 %v1479
    %1525 = vmatpush.msra.mxu0 %v1477
    %1526 = vmatpush.msra.mxu0 %v1475
    %1527 = vmatpush.msra.mxu0 %v1473
    %1528 = vmatpush.msra.mxu0 %v1471
    %1529 = vmatpush.msra.mxu0 %v1469
    %1530 = vmatpush.msra.mxu0 %v1467
    %1531 = vmatpush.msra.mxu0 %v1465
    %1532 = vmatpush.msra.mxu0 %v1463
    %1533 = vmatpush.msra.mxu0 %v1461
    %1534 = vmatpush.msra.mxu0 %v1459
    %1535 = vmatpush.msra.mxu0 %v1457
    %1536 = vmatpush.msra.mxu0 %v1455
    %1537 = vmatmul.f32.gmra.mxu0 %v1450
    %v1538 = vpop.f32.mrf.mxu0
    %v1539 = vadd.f32 %v1489, %v1538
    %1540 = vmatmul.f32.gmra.mxu0 %v1451
    %v1541 = vpop.f32.mrf.mxu0
    %v1542 = vadd.f32 %v1489, %v1541
    %1543 = vmatmul.f32.gmra.mxu0 %v1452
    %v1544 = vpop.f32.mrf.mxu0
    %v1545 = vadd.f32 %v1489, %v1544
    %1546 = vmatmul.f32.gmra.mxu0 %v1453
    %v1547 = vpop.f32.mrf.mxu0
    %v1548 = vadd.f32 %v1489, %v1547
    %1549 = vdwg.mxu0
    %v1550 = vmax.f32 %v1510, 0.0
    %v1551 = vmax.f32 %v1539, 0.0
    %v1552 = vmax.f32 %v1513, 0.0
    %v1553 = vmax.f32 %v1542, 0.0
    %v1554 = vmax.f32 %v1516, 0.0
    %v1555 = vmax.f32 %v1545, 0.0
    %v1556 = vmax.f32 %v1519, 0.0
    %v1557 = vmax.f32 %v1548, 0.0
    %v1558 = vld [vmem:[#allocation10] sm:$0xff]
    %v1559 = vld [vmem:[#allocation10 + $0x8] sm:$0xff]
    %v1560 = vld [vmem:[#allocation10 + $0x10] sm:$0xff]
    %v1561 = vld [vmem:[#allocation10 + $0x18] sm:$0xff]
    %v1562 = vld [vmem:[#allocation10 + $0x20] sm:$0xff]
    %v1563 = vld [vmem:[#allocation10 + $0x28] sm:$0xff]
    %v1564 = vld [vmem:[#allocation10 + $0x30] sm:$0xff]
    %v1565 = vld [vmem:[#allocation10 + $0x38] sm:$0xff]
    %v1566 = vld [vmem:[#allocation10 + $0x40] sm:$0xff]
    %v1567 = vld [vmem:[#allocation10 + $0x48] sm:$0xff]
    %v1568 = vld [vmem:[#allocation10 + $0x50] sm:$0xff]
    %v1569 = vld [vmem:[#allocation10 + $0x58] sm:$0xff]
    %v1570 = vld [vmem:[#allocation10 + $0x60] sm:$0xff]
    %v1571 = vld [vmem:[#allocation10 + $0x68] sm:$0xff]
    %v1572 = vld [vmem:[#allocation10 + $0x70] sm:$0xff]
    %v1573 = vld [vmem:[#allocation10 + $0x78] sm:$0xff]
    %v1574 = vld [vmem:[#allocation10 + $0x80] sm:$0xff]
    %v1575 = vld [vmem:[#allocation10 + $0x88] sm:$0xff]
    %v1576 = vld [vmem:[#allocation10 + $0x90] sm:$0xff]
    %v1577 = vld [vmem:[#allocation10 + $0x98] sm:$0xff]
    %v1578 = vld [vmem:[#allocation10 + $0xa0] sm:$0xff]
    %v1579 = vld [vmem:[#allocation10 + $0xa8] sm:$0xff]
    %v1580 = vld [vmem:[#allocation10 + $0xb0] sm:$0xff]
    %v1581 = vld [vmem:[#allocation10 + $0xb8] sm:$0xff]
    %v1582 = vld [vmem:[#allocation10 + $0xc0] sm:$0xff]
    %v1583 = vld [vmem:[#allocation10 + $0xc8] sm:$0xff]
    %v1584 = vld [vmem:[#allocation10 + $0xd0] sm:$0xff]
    %v1585 = vld [vmem:[#allocation10 + $0xd8] sm:$0xff]
    %v1586 = vld [vmem:[#allocation10 + $0xe0] sm:$0xff]
    %v1587 = vld [vmem:[#allocation10 + $0xe8] sm:$0xff]
    %v1588 = vld [vmem:[#allocation10 + $0xf0] sm:$0xff]
    %v1589 = vld [vmem:[#allocation10 + $0xf8] sm:$0xff]
    %v1590 = vld [vmem:[%s8] sm:$0x1]
    %v1592 = vperm.slane %v1590, 0
    %1594 = vmatpush.msra.mxu0 %v1573
    %1595 = vmatpush.msra.mxu0 %v1572
    %1596 = vmatpush.msra.mxu0 %v1571
    %1597 = vmatpush.msra.mxu0 %v1570
    %1598 = vmatpush.msra.mxu0 %v1569
    %1599 = vmatpush.msra.mxu0 %v1568
    %1600 = vmatpush.msra.mxu0 %v1567
    %1601 = vmatpush.msra.mxu0 %v1566
    %1602 = vmatpush.msra.mxu0 %v1565
    %1603 = vmatpush.msra.mxu0 %v1564
    %1604 = vmatpush.msra.mxu0 %v1563
    %1605 = vmatpush.msra.mxu0 %v1562
    %1606 = vmatpush.msra.mxu0 %v1561
    %1607 = vmatpush.msra.mxu0 %v1560
    %1608 = vmatpush.msra.mxu0 %v1559
    %1609 = vmatpush.msra.mxu0 %v1558
    %1610 = vmatmul.f32.gmra.mxu0 %v1550
    %v1611 = vpop.f32.mrf.mxu0
    %v1612 = vadd.f32 %v1592, %v1611
    %1613 = vmatmul.f32.gmra.mxu0 %v1552
    %v1614 = vpop.f32.mrf.mxu0
    %v1615 = vadd.f32 %v1592, %v1614
    %1616 = vmatmul.f32.gmra.mxu0 %v1554
    %v1617 = vpop.f32.mrf.mxu0
    %v1618 = vadd.f32 %v1592, %v1617
    %1619 = vmatmul.f32.gmra.mxu0 %v1556
    %v1620 = vpop.f32.mrf.mxu0
    %v1621 = vadd.f32 %v1592, %v1620
    %1622 = vdwg.mxu0
    %1623 = vmatpush.msra.mxu0 %v1589
    %1624 = vmatpush.msra.mxu0 %v1588
    %1625 = vmatpush.msra.mxu0 %v1587
    %1626 = vmatpush.msra.mxu0 %v1586
    %1627 = vmatpush.msra.mxu0 %v1585
    %1628 = vmatpush.msra.mxu0 %v1584
    %1629 = vmatpush.msra.mxu0 %v1583
    %1630 = vmatpush.msra.mxu0 %v1582
    %1631 = vmatpush.msra.mxu0 %v1581
    %1632 = vmatpush.msra.mxu0 %v1580
    %1633 = vmatpush.msra.mxu0 %v1579
    %1634 = vmatpush.msra.mxu0 %v1578
    %1635 = vmatpush.msra.mxu0 %v1577
    %1636 = vmatpush.msra.mxu0 %v1576
    %1637 = vmatpush.msra.mxu0 %v1575
    %1638 = vmatpush.msra.mxu0 %v1574
    %1639 = vmatmul.f32.gmra.mxu0 %v1551
    %v1640 = vpop.f32.mrf.mxu0
    %v1641 = vadd.f32 %v1612, %v1640
    %1642 = vmatmul.f32.gmra.mxu0 %v1553
    %v1643 = vpop.f32.mrf.mxu0
    %v1644 = vadd.f32 %v1615, %v1643
    %1645 = vmatmul.f32.gmra.mxu0 %v1555
    %v1646 = vpop.f32.mrf.mxu0
    %v1647 = vadd.f32 %v1618, %v1646
    %1648 = vmatmul.f32.gmra.mxu0 %v1557
    %v1649 = vpop.f32.mrf.mxu0
    %v1650 = vadd.f32 %v1621, %v1649
    %1651 = vdwg.mxu0
    %v1652 = vadd.f32 %v1450, %v1641
    %v1653 = vadd.f32 %v1451, %v1644
    %v1654 = vadd.f32 %v1452, %v1647
    %v1655 = vadd.f32 %v1453, %v1650
    %v1656 = vld [vmem:[%s11] sm:$0x1]
    %v1657 = vld [vmem:[%s12] sm:$0x1]
    %1658 = vadd.xlane.f32.xlu0 %v1652
    %v1659 = vpop.xlane.xlu0 %1658
    %1660 = vadd.xlane.f32.xlu0 %v1653
    %v1661 = vpop.xlane.xlu0 %1660
    %1662 = vadd.xlane.f32.xlu0 %v1654
    %v1663 = vpop.xlane.xlu0 %1662
    %1664 = vadd.xlane.f32.xlu0 %v1655
    %v1665 = vpop.xlane.xlu0 %1664
    %v1666 = vmul.f32 %v1659, %v1367
    %v1667 = vmul.f32 %v1661, %v1367
    %v1668 = vmul.f32 %v1663, %v1367
    %v1669 = vmul.f32 %v1665, %v1367
    %v1670 = vsub.f32 %v1652, %v1666
    %v1671 = vsub.f32 %v1653, %v1667
    %v1672 = vsub.f32 %v1654, %v1668
    %v1673 = vsub.f32 %v1655, %v1669
    %v1674 = vmul.f32 %v1670, %v1670
    %v1675 = vmul.f32 %v1671, %v1671
    %v1676 = vmul.f32 %v1672, %v1672
    %v1677 = vmul.f32 %v1673, %v1673
    %1678 = vadd.xlane.f32.xlu0 %v1674
    %v1679 = vpop.xlane.xlu0 %1678
    %1680 = vadd.xlane.f32.xlu0 %v1675
    %v1681 = vpop.xlane.xlu0 %1680
    %1682 = vadd.xlane.f32.xlu0 %v1676
    %v1683 = vpop.xlane.xlu0 %1682
    %1684 = vadd.xlane.f32.xlu0 %v1677
    %v1685 = vpop.xlane.xlu0 %1684
    %v1686 = vmul.f32 %v1679, %v1367
    %v1687 = vmul.f32 %v1681, %v1367
    %v1688 = vmul.f32 %v1683, %v1367
    %v1689 = vmul.f32 %v1685, %v1367
    %v1690 = vadd.f32 %v1686, 1e-05
    %v1691 = vadd.f32 %v1687, 1e-05
    %v1692 = vadd.f32 %v1688, 1e-05
    %v1693 = vadd.f32 %v1689, 1e-05
    %v1694 = vrsqrt.pop %v1690
    %v1695 = vmul.f32 %v1694, %v1690
    %v1696 = vmul.f32 %v1695, %v1694
    %v1697 = vmul.f32 0.5, %v1696
    %v1698 = vsub.f32 1.5, %v1697
    %v1699 = vmul.f32 %v1694, %v1698
    %vm1700 = vweird.f32 %v1690
    %vm1701 = vweird.f32 %v1694
    %vm1702 = vmor %vm1700, %vm1701
    %v1703 = vsel %vm1702, %v1694, %v1699
    %v1704 = vrsqrt.pop %v1691
    %v1705 = vmul.f32 %v1704, %v1691
    %v1706 = vmul.f32 %v1705, %v1704
    %v1707 = vmul.f32 0.5, %v1706
    %v1708 = vsub.f32 1.5, %v1707
    %v1709 = vmul.f32 %v1704, %v1708
    %vm1710 = vweird.f32 %v1691
    %vm1711 = vweird.f32 %v1704
    %vm1712 = vmor %vm1710, %vm1711
    %v1713 = vsel %vm1712, %v1704, %v1709
    %v1714 = vrsqrt.pop %v1692
    %v1715 = vmul.f32 %v1714, %v1692
    %v1716 = vmul.f32 %v1715, %v1714
    %v1717 = vmul.f32 0.5, %v1716
    %v1718 = vsub.f32 1.5, %v1717
    %v1719 = vmul.f32 %v1714, %v1718
    %vm1720 = vweird.f32 %v1692
    %vm1721 = vweird.f32 %v1714
    %vm1722 = vmor %vm1720, %vm1721
    %v1723 = vsel %vm1722, %v1714, %v1719
    %v1724 = vrsqrt.pop %v1693
    %v1725 = vmul.f32 %v1724, %v1693
    %v1726 = vmul.f32 %v1725, %v1724
    %v1727 = vmul.f32 0.5, %v1726
    %v1728 = vsub.f32 1.5, %v1727
    %v1729 = vmul.f32 %v1724, %v1728
    %vm1730 = vweird.f32 %v1693
    %vm1731 = vweird.f32 %v1724
    %vm1732 = vmor %vm1730, %vm1731
    %v1733 = vsel %vm1732, %v1724, %v1729
    %v1734 = vmul.f32 %v1670, %v1703
    %v1735 = vmul.f32 %v1671, %v1713
    %v1736 = vmul.f32 %v1672, %v1723
    %v1737 = vmul.f32 %v1673, %v1733
    %v1739 = vperm.slane %v1656, 0
    %v1741 = vmul.f32 %v1734, %v1739
    %v1742 = vmul.f32 %v1735, %v1739
    %v1743 = vmul.f32 %v1736, %v1739
    %v1744 = vmul.f32 %v1737, %v1739
    %v1746 = vperm.slane %v1657, 0
    %v1748 = vadd.f32 %v1741, %v1746
    %v1749 = vadd.f32 %v1742, %v1746
    %v1750 = vadd.f32 %v1743, %v1746
    %v1751 = vadd.f32 %v1744, %v1746
    %1752 = vst [vmem:[#allocation11] sm:$0xff] %v1748
    %1753 = vst [vmem:[#allocation11 + $0x10] sm:$0xff] %v1749
    %1754 = vst [vmem:[#allocation11 + $0x8] sm:$0xff] %v1750
    %1755 = vst [vmem:[#allocation11 + $0x18] sm:$0xff] %v1751
    // Predicated region
    $region74: #{tpu_custom_call.1} parent=1 // pred_check
      _
    $region75: #{tpu_custom_call.1} parent=1 // pred_check_branch
      %1757 = sbr.rel (0) target = $region77
    $region76: #{tpu_custom_call.1} parent=1 // pred_region
      %1759 = vsyncadd [#allocation4], 0
      %s1760 = sshll.u32 [#allocation11], 4
      %s1761 = int_to_ptr.vmem [resolvable:$true] %s1760
      %s1762 = sshll.u32 %s13, 4
      %s1763 = int_to_ptr.hbm [resolvable:$true] %s1762
      %1768 = dma.vmem_to_hbm [thread:$0]  %s1761, 512, %s1763, [#allocation4], 256, 256, 16
    $region77: #{tpu_custom_call.1} parent=1 // pred_fallthru
      _
    // Predicated region
    $region78: #{tpu_custom_call.1} parent=1 // pred_check
      _
    $region79: #{tpu_custom_call.1} parent=1 // pred_check_branch
      %1770 = sbr.rel (0) target = $region81
    $region80: #{tpu_custom_call.1} parent=1 // pred_region
      %1772 = dma.done [#allocation4], 512
    $region81: #{tpu_custom_call.1} parent=1 // pred_fallthru
      _
    %1773 = vsyncpa [#allocation3], 1
    %1774 = vsyncpa [#allocation6], 1
    %1775 = vsyncpa [#allocation9], 1
    %1776 = vsyncpa [#allocation4], 1

</llo_original>
